<compile_context>
chip_gen: v7x
topology: tpu7x:2x2x1
jax: 0.10.0
libtpu: 0.0.40
codegen_flags: <defaults>
</compile_context>

<pallas_src>
import functools

import jax
import jax.numpy as jnp
from jax.experimental import pallas as pl
from jax.experimental.pallas import tpu as pltpu

Z_DIM = 100
H1 = 128
H2 = 256
IMG_DIM = 28 * 28      # 784


def _round_up(n, m):
    return ((n + m - 1) // m) * m


def _leaky_relu(x, slope=0.2):
    # max(x, 0.2*x) == LeakyReLU(0.2) for slope in (0, 1); one VPU op.
    return jnp.maximum(x, slope * x)


def generator_kernel(x_ref, w1_ref, b1_ref, w2_ref, b2_ref, w3_ref, b3_ref, o_ref):
    # Matmuls on the MXU with f32 accumulation; bias add / LeakyReLU on the VPU
    # in f32; tanh on the EUP; the final store casts to the output dtype
    # (bf16 by default, halving the dominant HBM write).
    x = x_ref[...].astype(w1_ref.dtype)     # VMEM-local cast, no HBM pass

    h = jnp.dot(x, w1_ref[...], preferred_element_type=jnp.float32) + b1_ref[...]
    h = _leaky_relu(h)

    h = jnp.dot(h.astype(w2_ref.dtype), w2_ref[...],
                preferred_element_type=jnp.float32) + b2_ref[...]
    h = _leaky_relu(h)

    h = jnp.dot(h.astype(w3_ref.dtype), w3_ref[...],
                preferred_element_type=jnp.float32) + b3_ref[...]
    o_ref[...] = jnp.tanh(h).astype(o_ref.dtype)


def prepare_params(params, use_bf16=True):
    """One-time parameter prep (call ONCE, outside the per-step forward path).

    Casts weights to the MXU operand / HBM storage dtype.  Biases stay f32
    (they are added to the f32 accumulator inside the kernel).
    """
    w1, b1, w2, b2, w3, b3 = params
    op_dtype = jnp.bfloat16 if use_bf16 else jnp.float32
    return (w1.astype(op_dtype), b1.astype(jnp.float32),
            w2.astype(op_dtype), b2.astype(jnp.float32),
            w3.astype(op_dtype), b3.astype(jnp.float32))


@functools.partial(jax.jit, static_argnames=("batch_tile",))
def generator_forward(x, prepared_params, batch_tile=256):
    """x: (B, Z_DIM) f32 -> (B, IMG_DIM).

    Output dtype follows the prepared weights' dtype (bf16 by default).
    batch_tile guidance: v7x -> keep >= 2 grid steps (tile <= B/2);
    v5e/v6e (single TC) -> one large tile (512-2048) per call.
    """
    assert batch_tile % 8 == 0, "batch_tile must be a multiple of the sublane count"
    w1, b1, w2, b2, w3, b3 = prepared_params
    op_dtype = w1.dtype
    out_dtype = op_dtype
    # bf16 rows pack 2-per-sublane: keep tiles a multiple of 16 so output
    # stores stay unmasked on the sublane axis.
    sub = 16 if op_dtype == jnp.bfloat16 else 8

    B = x.shape[0]
    bt = _round_up(min(batch_tile, _round_up(B, sub)), sub)
    B_pad = _round_up(B, bt)
    if B_pad != B:
        x = jnp.pad(x, ((0, B_pad - B), (0, 0)))   # ragged batch only
    grid = (B_pad // bt,)

    out = pl.pallas_call(
        generator_kernel,
        out_shape=jax.ShapeDtypeStruct((B_pad, IMG_DIM), out_dtype),
        grid_spec=pltpu.PrefetchScalarGridSpec(
            num_scalar_prefetch=0,
            grid=grid,
            in_specs=[
                # Last dims equal the full array dims -> no padding needed.
                pl.BlockSpec((bt, Z_DIM), lambda i: (i, 0)),
                pl.BlockSpec((Z_DIM, H1), lambda i: (0, 0)),
                pl.BlockSpec((1, H1), lambda i: (0, 0)),
                pl.BlockSpec((H1, H2), lambda i: (0, 0)),
                pl.BlockSpec((1, H2), lambda i: (0, 0)),
                pl.BlockSpec((H2, IMG_DIM), lambda i: (0, 0)),
                pl.BlockSpec((1, IMG_DIM), lambda i: (0, 0)),
            ],
            out_specs=pl.BlockSpec((bt, IMG_DIM), lambda i: (i, 0)),
        ),
        compiler_params=pltpu.CompilerParams(
            dimension_semantics=("parallel",),      # batch tiles shard across TCs (v7x)
            vmem_limit_bytes=32 * 1024 * 1024,      # safe on v7x's 64 MiB physical VMEM
        ),
    )(x, w1, b1, w2, b2, w3, b3)

    if B_pad == B:
        return out                                  # no depad copy on the hot path
    return out[:B]


def init_params(key):
    """Deterministic parameter init matching nn.Linear shapes (stored as (in, out))."""
    ks = jax.random.split(key, 6)

    def linear(k_w, k_b, fan_in, fan_out):
        # PyTorch default init: U(-1/sqrt(fan_in), 1/sqrt(fan_in))
        bound = 1.0 / jnp.sqrt(fan_in)
        w = jax.random.uniform(k_w, (fan_in, fan_out), jnp.float32, -bound, bound)
        b = jax.random.uniform(k_b, (1, fan_out), jnp.float32, -bound, bound)
        return w, b

    w1, b1 = linear(ks[0], ks[1], Z_DIM, H1)
    w2, b2 = linear(ks[2], ks[3], H1, H2)
    w3, b3 = linear(ks[4], ks[5], H2, IMG_DIM)
    return (w1, b1, w2, b2, w3, b3)


def reference_forward(x, params):
    w1, b1, w2, b2, w3, b3 = params
    h = _leaky_relu(x @ w1 + b1)
    h = _leaky_relu(h @ w2 + b2)
    return jnp.tanh(h @ w3 + b3)


if __name__ == "__main__":
    key = jax.random.PRNGKey(0)
    k_param, k_x = jax.random.split(key)
    params = init_params(k_param)

    # One-time prep (outside the per-call path).
    prep_f32 = prepare_params(params, use_bf16=False)
    prep_bf16 = prepare_params(params, use_bf16=True)   # default inference path

    # B=512 with batch_tile=256 -> 2-step "parallel" grid (both v7x TCs),
    # full-height MXU tiles, and no batch padding / no output slice.
    B = 512
    x = jax.random.normal(k_x, (B, Z_DIM), dtype=jnp.float32)
    ref = reference_forward(x, params)

    # f32 path: tight check against the pure-JAX reference.
    out = jax.block_until_ready(generator_forward(x, prep_f32, batch_tile=256))
    assert out.shape == (B, IMG_DIM), out.shape
    assert out.dtype == jnp.float32
    assert jnp.allclose(out, ref, atol=1e-5, rtol=1e-5), "f32 kernel mismatch vs reference"

    # bf16 storage/operand path (default): looser tolerance, bf16 output.
    out_bf16 = jax.block_until_ready(generator_forward(x, prep_bf16, batch_tile=256))
    assert out_bf16.dtype == jnp.bfloat16
    assert jnp.allclose(out_bf16.astype(jnp.float32), ref, atol=2e-2, rtol=2e-2), \
        "bf16 kernel mismatch vs reference"

    # Ragged small batch: exercises the batch-padding + batch-slice path.
    x_small = jax.random.normal(jax.random.PRNGKey(1), (10, Z_DIM), dtype=jnp.float32)
    ref_small = reference_forward(x_small, params)
    out_small = jax.block_until_ready(generator_forward(x_small, prep_f32, batch_tile=256))
    assert out_small.shape == (10, IMG_DIM)
    assert jnp.allclose(out_small, ref_small, atol=1e-5, rtol=1e-5), "ragged-batch mismatch"

    out_small_bf16 = jax.block_until_ready(
        generator_forward(x_small, prep_bf16, batch_tile=256))
    assert out_small_bf16.shape == (10, IMG_DIM)
    assert jnp.allclose(out_small_bf16.astype(jnp.float32), ref_small,
                        atol=2e-2, rtol=2e-2), "ragged-batch bf16 mismatch"

    print("KERNEL_OK")
</pallas_src>

<mosaic_0001>
module attributes {stable_mosaic.version = 11 : i64} {
  func.func @generator_kernel(%arg0: i32, %arg1: memref<256x100xf32, #tpu.memory_space<vmem>>, %arg2: memref<100x128xf32, #tpu.memory_space<vmem>>, %arg3: memref<1x128xf32, #tpu.memory_space<vmem>>, %arg4: memref<128x256xf32, #tpu.memory_space<vmem>>, %arg5: memref<1x256xf32, #tpu.memory_space<vmem>>, %arg6: memref<256x784xf32, #tpu.memory_space<vmem>>, %arg7: memref<1x784xf32, #tpu.memory_space<vmem>>, %arg8: memref<256x784xf32, #tpu.memory_space<vmem>>) attributes {dimension_semantics = [#tpu.dimension_semantics<parallel>], iteration_bounds = array<i64: 2>, scalar_prefetch = 0 : i64, scratch_operands = 0 : i64, tpu.core_type = #tpu.core_type<tc>, window_params = [{transform_indices = @transform_0, window_bounds = array<i64: 256, 100>}, {pipeline_mode = #tpu.pipeline_mode<synchronous>, transform_indices = @transform_1, window_bounds = array<i64: 100, 128>}, {pipeline_mode = #tpu.pipeline_mode<synchronous>, transform_indices = @transform_2, window_bounds = array<i64: 1, 128>}, {pipeline_mode = #tpu.pipeline_mode<synchronous>, transform_indices = @transform_3, window_bounds = array<i64: 128, 256>}, {pipeline_mode = #tpu.pipeline_mode<synchronous>, transform_indices = @transform_4, window_bounds = array<i64: 1, 256>}, {pipeline_mode = #tpu.pipeline_mode<synchronous>, transform_indices = @transform_5, window_bounds = array<i64: 256, 784>}, {pipeline_mode = #tpu.pipeline_mode<synchronous>, transform_indices = @transform_6, window_bounds = array<i64: 1, 784>}, {transform_indices = @transform_7, window_bounds = array<i64: 256, 784>}]} {
    %c0 = arith.constant 0 : index
    %c0_0 = arith.constant 0 : index
    %0 = vector.load %arg1[%c0, %c0_0] : memref<256x100xf32, #tpu.memory_space<vmem>>, vector<256x100xf32>
    %c0_1 = arith.constant 0 : index
    %c0_2 = arith.constant 0 : index
    %1 = vector.load %arg2[%c0_1, %c0_2] : memref<100x128xf32, #tpu.memory_space<vmem>>, vector<100x128xf32>
    %cst = arith.constant dense<0.000000e+00> : vector<256x128xf32>
    %2 = tpu.matmul %0, %1, %cst {dimension_numbers = #tpu.dot_dimension_numbers<[1], [0], [0], [1], [0, 0, 1, 1], [], []>} : vector<256x100xf32>, vector<100x128xf32>, vector<256x128xf32> -> vector<256x128xf32>
    %c0_3 = arith.constant 0 : index
    %c0_4 = arith.constant 0 : index
    %3 = vector.load %arg3[%c0_3, %c0_4] : memref<1x128xf32, #tpu.memory_space<vmem>>, vector<1x128xf32>
    %4 = vector.broadcast %3 : vector<1x128xf32> to vector<256x128xf32>
    %5 = arith.addf %2, %4 : vector<256x128xf32>
    %cst_5 = arith.constant 2.000000e-01 : f32
    %6 = vector.broadcast %cst_5 : f32 to vector<256x128xf32>
    %7 = arith.mulf %6, %5 : vector<256x128xf32>
    %8 = arith.maximumf %5, %7 : vector<256x128xf32>
    %c0_6 = arith.constant 0 : index
    %c0_7 = arith.constant 0 : index
    %9 = vector.load %arg4[%c0_6, %c0_7] : memref<128x256xf32, #tpu.memory_space<vmem>>, vector<128x256xf32>
    %cst_8 = arith.constant dense<0.000000e+00> : vector<256x256xf32>
    %10 = tpu.matmul %8, %9, %cst_8 {dimension_numbers = #tpu.dot_dimension_numbers<[1], [0], [0], [1], [0, 0, 1, 1], [], []>} : vector<256x128xf32>, vector<128x256xf32>, vector<256x256xf32> -> vector<256x256xf32>
    %c0_9 = arith.constant 0 : index
    %c0_10 = arith.constant 0 : index
    %11 = vector.load %arg5[%c0_9, %c0_10] : memref<1x256xf32, #tpu.memory_space<vmem>>, vector<1x256xf32>
    %12 = vector.broadcast %11 : vector<1x256xf32> to vector<256x256xf32>
    %13 = arith.addf %10, %12 : vector<256x256xf32>
    %cst_11 = arith.constant 2.000000e-01 : f32
    %14 = vector.broadcast %cst_11 : f32 to vector<256x256xf32>
    %15 = arith.mulf %14, %13 : vector<256x256xf32>
    %16 = arith.maximumf %13, %15 : vector<256x256xf32>
    %c0_12 = arith.constant 0 : index
    %c0_13 = arith.constant 0 : index
    %17 = vector.load %arg6[%c0_12, %c0_13] : memref<256x784xf32, #tpu.memory_space<vmem>>, vector<256x784xf32>
    %cst_14 = arith.constant dense<0.000000e+00> : vector<256x784xf32>
    %18 = tpu.matmul %16, %17, %cst_14 {dimension_numbers = #tpu.dot_dimension_numbers<[1], [0], [0], [1], [0, 0, 1, 1], [], []>} : vector<256x256xf32>, vector<256x784xf32>, vector<256x784xf32> -> vector<256x784xf32>
    %c0_15 = arith.constant 0 : index
    %c0_16 = arith.constant 0 : index
    %19 = vector.load %arg7[%c0_15, %c0_16] : memref<1x784xf32, #tpu.memory_space<vmem>>, vector<1x784xf32>
    %20 = vector.broadcast %19 : vector<1x784xf32> to vector<256x784xf32>
    %21 = arith.addf %18, %20 : vector<256x784xf32>
    %22 = math.tanh %21 : vector<256x784xf32>
    %c0_17 = arith.constant 0 : index
    %c0_18 = arith.constant 0 : index
    %23 = vector.load %arg8[%c0_17, %c0_18] : memref<256x784xf32, #tpu.memory_space<vmem>>, vector<256x784xf32>
    tpu.vector_store %arg8[%c0_17, %c0_18], %22 {strides = array<i32>} : memref<256x784xf32, #tpu.memory_space<vmem>>, vector<256x784xf32>,
    return
  }
  func.func @transform_0(%arg0: i32) -> (i32, i32) {
    %c0_i32 = arith.constant 0 : i32
    %c0_i32_0 = arith.constant 0 : i32
    return %arg0, %c0_i32 : i32, i32
  }
  func.func @transform_1(%arg0: i32) -> (i32, i32) {
    %c0_i32 = arith.constant 0 : i32
    %c0_i32_0 = arith.constant 0 : i32
    %c0_i32_1 = arith.constant 0 : i32
    return %c0_i32, %c0_i32_0 : i32, i32
  }
  func.func @transform_2(%arg0: i32) -> (i32, i32) {
    %c0_i32 = arith.constant 0 : i32
    %c0_i32_0 = arith.constant 0 : i32
    %c0_i32_1 = arith.constant 0 : i32
    return %c0_i32, %c0_i32_0 : i32, i32
  }
  func.func @transform_3(%arg0: i32) -> (i32, i32) {
    %c0_i32 = arith.constant 0 : i32
    %c0_i32_0 = arith.constant 0 : i32
    %c0_i32_1 = arith.constant 0 : i32
    return %c0_i32, %c0_i32_0 : i32, i32
  }
  func.func @transform_4(%arg0: i32) -> (i32, i32) {
    %c0_i32 = arith.constant 0 : i32
    %c0_i32_0 = arith.constant 0 : i32
    %c0_i32_1 = arith.constant 0 : i32
    return %c0_i32, %c0_i32_0 : i32, i32
  }
  func.func @transform_5(%arg0: i32) -> (i32, i32) {
    %c0_i32 = arith.constant 0 : i32
    %c0_i32_0 = arith.constant 0 : i32
    %c0_i32_1 = arith.constant 0 : i32
    return %c0_i32, %c0_i32_0 : i32, i32
  }
  func.func @transform_6(%arg0: i32) -> (i32, i32) {
    %c0_i32 = arith.constant 0 : i32
    %c0_i32_0 = arith.constant 0 : i32
    %c0_i32_1 = arith.constant 0 : i32
    return %c0_i32, %c0_i32_0 : i32, i32
  }
  func.func @transform_7(%arg0: i32) -> (i32, i32) {
    %c0_i32 = arith.constant 0 : i32
    %c0_i32_0 = arith.constant 0 : i32
    return %arg0, %c0_i32 : i32, i32
  }
}

</mosaic_0001>

<llo_original>
// kernel: generator_forward.1
$region0: #{generator_forward.1}
  #allocation0 [shape = 'u32[]', space=smem, size = 0x4, offset = 0x4, fixed_abs, tag = 'smem constant byte address 0x4 - core index']
  #allocation1 [shape = 'u32[144,128]{1,0:T(1,128)}', space=vmem, size = 0x12000, scoped, tag = 'internal scratch']
  %s0 = inlined_call_operand.vmem [shape: f32[512,100], index: 0, kind: input, shape index: {}]
  %s1 = inlined_call_operand.vmem [shape: f32[100,128], index: 1, kind: input, shape index: {}]
  %s2 = inlined_call_operand.vmem [shape: f32[1,128], index: 2, kind: input, shape index: {}]
  %s3 = inlined_call_operand.vmem [shape: f32[128,256], index: 3, kind: input, shape index: {}]
  %s4 = inlined_call_operand.vmem [shape: f32[1,256], index: 4, kind: input, shape index: {}]
  %s5 = inlined_call_operand.vmem [shape: f32[256,784], index: 5, kind: input, shape index: {}]
  %s6 = inlined_call_operand.vmem [shape: f32[1,784], index: 6, kind: input, shape index: {}]
  %s7 = inlined_call_operand.vmem [shape: f32[512,784], index: 7, kind: output, shape index: {}]
  %s8 = sld [smem:[#allocation0]]
  $region61: #{generator_forward.1} parent=0
    _
  %s10 = ssub.s32 1, %s8
  %s11 = scalar_select 0, %s10, %s8
  loop: start=0, step=1, limit=4
  $region2: #{generator_forward.1} parent=0 // loop_pre_header
    _
  $region3: #{generator_forward.1} parent=0 // loop_header
    %s13 = sphi 0, %s17
    %p14 = scmp.ge.s32.totalorder %s13, 4
    %s23 = sphi 0, %s25
    %s26 = sphi 0, %s23
    %s27 = sphi 0, %s26
    %s43 = sphi 0, %s27
    %s47 = sphi 0, %s47
    %s49 = sphi 0, %s47
    %s50 = sphi 0, %s49
    %s64 = sphi 0, %s50
    %s68 = sphi 0, %s68
    %s70 = sphi 0, %s68
    %s71 = sphi 0, %s70
    %s85 = sphi 0, %s71
    %s89 = sphi 0, %s89
    %s91 = sphi 0, %s89
    %s92 = sphi 0, %s91
    %s106 = sphi 0, %s92
    %s110 = sphi 0, %s110
    %s112 = sphi 0, %s110
    %s113 = sphi 0, %s112
    %s127 = sphi 0, %s113
    %s131 = sphi 0, %s131
    %s133 = sphi 0, %s131
    %s134 = sphi 0, %s133
    %s148 = sphi 0, %s134
    %s152 = sphi 0, %s152
    %s154 = sphi 0, %s152
    %s155 = sphi 0, %s154
    %s169 = sphi 0, %s155
    %s175 = sphi 0, %s177
    %s178 = sphi 0, %s175
    %s179 = sphi 0, %s178
    %s195 = sphi 0, %s179
  $region4: #{generator_forward.1} parent=0 // loop_header_branch
    %16 = sbr.rel (%p14) target = $region8
  $region5: #{generator_forward.1} parent=0 // loop_body
    %s18 = ssub.s32 %s13, 1
    %s19 = ssub.s32 %s13, 2
    %s20 = sadd.s32 %s13, 1
    %s21 = ssub.s32 %s13, %s20
    %p22 = scmp.eq.s32.totalorder %s21, 0
    %s24 = sadd.s32 %s23, 1
    %s25 = scalar_select %p22, %s23, %s24
    %p28 = pneg %p22
    %p29 = scmp.eq.s32.totalorder %s13, 1
    %p30 = por %p28, %p29
    %p31 = scmp.ne.s32.totalorder %s23, %s26
    %p32 = scmp.eq.s32.totalorder %s13, 0
    %p33 = por %p31, %p32
    %p34 = scmp.ne.s32.totalorder %s23, %s26
    %p35 = scmp.eq.s32.totalorder %s18, 1
    %p36 = por %p34, %p35
    %p37 = scmp.ne.s32.totalorder %s26, %s27
    %p38 = scmp.eq.s32.totalorder %s18, 0
    %p39 = por %p37, %p38
    %p40 = scmp.ne.s32.totalorder %s26, %s27
    %p41 = scmp.eq.s32.totalorder %s19, 1
    %p42 = por %p40, %p41
    %p44 = scmp.ne.s32.totalorder %s27, %s43
    %p45 = scmp.eq.s32.totalorder %s19, 0
    %p46 = por %p44, %p45
    %s48 = sadd.s32 %s47, 1
    %p51 = scmp.eq.s32.totalorder %s13, 1
    %p52 = scmp.ne.s32.totalorder %s47, %s49
    %p53 = scmp.eq.s32.totalorder %s13, 0
    %p54 = por %p52, %p53
    %p55 = scmp.ne.s32.totalorder %s47, %s49
    %p56 = scmp.eq.s32.totalorder %s18, 1
    %p57 = por %p55, %p56
    %p58 = scmp.ne.s32.totalorder %s49, %s50
    %p59 = scmp.eq.s32.totalorder %s18, 0
    %p60 = por %p58, %p59
    %p61 = scmp.ne.s32.totalorder %s49, %s50
    %p62 = scmp.eq.s32.totalorder %s19, 1
    %p63 = por %p61, %p62
    %p65 = scmp.ne.s32.totalorder %s50, %s64
    %p66 = scmp.eq.s32.totalorder %s19, 0
    %p67 = por %p65, %p66
    %s69 = sadd.s32 %s68, 1
    %p72 = scmp.eq.s32.totalorder %s13, 1
    %p73 = scmp.ne.s32.totalorder %s68, %s70
    %p74 = scmp.eq.s32.totalorder %s13, 0
    %p75 = por %p73, %p74
    %p76 = scmp.ne.s32.totalorder %s68, %s70
    %p77 = scmp.eq.s32.totalorder %s18, 1
    %p78 = por %p76, %p77
    %p79 = scmp.ne.s32.totalorder %s70, %s71
    %p80 = scmp.eq.s32.totalorder %s18, 0
    %p81 = por %p79, %p80
    %p82 = scmp.ne.s32.totalorder %s70, %s71
    %p83 = scmp.eq.s32.totalorder %s19, 1
    %p84 = por %p82, %p83
    %p86 = scmp.ne.s32.totalorder %s71, %s85
    %p87 = scmp.eq.s32.totalorder %s19, 0
    %p88 = por %p86, %p87
    %s90 = sadd.s32 %s89, 1
    %p93 = scmp.eq.s32.totalorder %s13, 1
    %p94 = scmp.ne.s32.totalorder %s89, %s91
    %p95 = scmp.eq.s32.totalorder %s13, 0
    %p96 = por %p94, %p95
    %p97 = scmp.ne.s32.totalorder %s89, %s91
    %p98 = scmp.eq.s32.totalorder %s18, 1
    %p99 = por %p97, %p98
    %p100 = scmp.ne.s32.totalorder %s91, %s92
    %p101 = scmp.eq.s32.totalorder %s18, 0
    %p102 = por %p100, %p101
    %p103 = scmp.ne.s32.totalorder %s91, %s92
    %p104 = scmp.eq.s32.totalorder %s19, 1
    %p105 = por %p103, %p104
    %p107 = scmp.ne.s32.totalorder %s92, %s106
    %p108 = scmp.eq.s32.totalorder %s19, 0
    %p109 = por %p107, %p108
    %s111 = sadd.s32 %s110, 1
    %p114 = scmp.eq.s32.totalorder %s13, 1
    %p115 = scmp.ne.s32.totalorder %s110, %s112
    %p116 = scmp.eq.s32.totalorder %s13, 0
    %p117 = por %p115, %p116
    %p118 = scmp.ne.s32.totalorder %s110, %s112
    %p119 = scmp.eq.s32.totalorder %s18, 1
    %p120 = por %p118, %p119
    %p121 = scmp.ne.s32.totalorder %s112, %s113
    %p122 = scmp.eq.s32.totalorder %s18, 0
    %p123 = por %p121, %p122
    %p124 = scmp.ne.s32.totalorder %s112, %s113
    %p125 = scmp.eq.s32.totalorder %s19, 1
    %p126 = por %p124, %p125
    %p128 = scmp.ne.s32.totalorder %s113, %s127
    %p129 = scmp.eq.s32.totalorder %s19, 0
    %p130 = por %p128, %p129
    %s132 = sadd.s32 %s131, 1
    %p135 = scmp.eq.s32.totalorder %s13, 1
    %p136 = scmp.ne.s32.totalorder %s131, %s133
    %p137 = scmp.eq.s32.totalorder %s13, 0
    %p138 = por %p136, %p137
    %p139 = scmp.ne.s32.totalorder %s131, %s133
    %p140 = scmp.eq.s32.totalorder %s18, 1
    %p141 = por %p139, %p140
    %p142 = scmp.ne.s32.totalorder %s133, %s134
    %p143 = scmp.eq.s32.totalorder %s18, 0
    %p144 = por %p142, %p143
    %p145 = scmp.ne.s32.totalorder %s133, %s134
    %p146 = scmp.eq.s32.totalorder %s19, 1
    %p147 = por %p145, %p146
    %p149 = scmp.ne.s32.totalorder %s134, %s148
    %p150 = scmp.eq.s32.totalorder %s19, 0
    %p151 = por %p149, %p150
    %s153 = sadd.s32 %s152, 1
    %p156 = scmp.eq.s32.totalorder %s13, 1
    %p157 = scmp.ne.s32.totalorder %s152, %s154
    %p158 = scmp.eq.s32.totalorder %s13, 0
    %p159 = por %p157, %p158
    %p160 = scmp.ne.s32.totalorder %s152, %s154
    %p161 = scmp.eq.s32.totalorder %s18, 1
    %p162 = por %p160, %p161
    %p163 = scmp.ne.s32.totalorder %s154, %s155
    %p164 = scmp.eq.s32.totalorder %s18, 0
    %p165 = por %p163, %p164
    %p166 = scmp.ne.s32.totalorder %s154, %s155
    %p167 = scmp.eq.s32.totalorder %s19, 1
    %p168 = por %p166, %p167
    %p170 = scmp.ne.s32.totalorder %s155, %s169
    %p171 = scmp.eq.s32.totalorder %s19, 0
    %p172 = por %p170, %p171
    %s173 = ssub.s32 %s13, %s20
    %p174 = scmp.eq.s32.totalorder %s173, 0
    %s176 = sadd.s32 %s175, 1
    %s177 = scalar_select %p174, %s175, %s176
    %p180 = pneg %p174
    %p181 = scmp.eq.s32.totalorder %s13, 1
    %p182 = por %p180, %p181
    %p183 = scmp.ne.s32.totalorder %s175, %s178
    %p184 = scmp.eq.s32.totalorder %s13, 0
    %p185 = por %p183, %p184
    %p186 = scmp.ne.s32.totalorder %s175, %s178
    %p187 = scmp.eq.s32.totalorder %s18, 1
    %p188 = por %p186, %p187
    %p189 = scmp.ne.s32.totalorder %s178, %s179
    %p190 = scmp.eq.s32.totalorder %s18, 0
    %p191 = por %p189, %p190
    %p192 = scmp.ne.s32.totalorder %s178, %s179
    %p193 = scmp.eq.s32.totalorder %s19, 1
    %p194 = por %p192, %p193
    %p196 = scmp.ne.s32.totalorder %s179, %s195
    %p197 = scmp.eq.s32.totalorder %s19, 0
    %p198 = por %p196, %p197
    %p199 = scmp.le.s32.totalorder 1, %s13
    %p200 = scmp.lt.s32.totalorder %s13, 3
    %p201 = pnand %p199, %p200
    %p202 = pneg %p201
    // Predicated region
    $region9: #{generator_forward.1} parent=5 // pred_check
      _
    $region10: #{generator_forward.1} parent=5 // pred_check_branch
      %204 = sbr.rel (%p201) target = $region12
    $region11: #{generator_forward.1} parent=5 // pred_region
      %s205 = ssub.s32 %s13, 1
      // Predicated region
      $region13: #{generator_forward.1} parent=11 // pred_check
        %p206 = pneg %p60
      $region14: #{generator_forward.1} parent=11 // pred_check_branch
        %208 = sbr.rel (%p206) target = $region16
      $region15: #{generator_forward.1} parent=11 // pred_region
        _
      $region16: #{generator_forward.1} parent=11 // pred_fallthru
        _
      // Predicated region
      $region17: #{generator_forward.1} parent=11 // pred_check
        %p209 = pneg %p81
      $region18: #{generator_forward.1} parent=11 // pred_check_branch
        %211 = sbr.rel (%p209) target = $region20
      $region19: #{generator_forward.1} parent=11 // pred_region
        _
      $region20: #{generator_forward.1} parent=11 // pred_fallthru
        _
      // Predicated region
      $region21: #{generator_forward.1} parent=11 // pred_check
        %p212 = pneg %p102
      $region22: #{generator_forward.1} parent=11 // pred_check_branch
        %214 = sbr.rel (%p212) target = $region24
      $region23: #{generator_forward.1} parent=11 // pred_region
        _
      $region24: #{generator_forward.1} parent=11 // pred_fallthru
        _
      // Predicated region
      $region25: #{generator_forward.1} parent=11 // pred_check
        %p215 = pneg %p123
      $region26: #{generator_forward.1} parent=11 // pred_check_branch
        %217 = sbr.rel (%p215) target = $region28
      $region27: #{generator_forward.1} parent=11 // pred_region
        _
      $region28: #{generator_forward.1} parent=11 // pred_fallthru
        _
      // Predicated region
      $region29: #{generator_forward.1} parent=11 // pred_check
        %p218 = pneg %p144
      $region30: #{generator_forward.1} parent=11 // pred_check_branch
        %220 = sbr.rel (%p218) target = $region32
      $region31: #{generator_forward.1} parent=11 // pred_region
        _
      $region32: #{generator_forward.1} parent=11 // pred_fallthru
        _
      // Predicated region
      $region33: #{generator_forward.1} parent=11 // pred_check
        %p221 = pneg %p165
      $region34: #{generator_forward.1} parent=11 // pred_check_branch
        %223 = sbr.rel (%p221) target = $region36
      $region35: #{generator_forward.1} parent=11 // pred_region
        _
      $region36: #{generator_forward.1} parent=11 // pred_fallthru
        _
    $region12: #{generator_forward.1} parent=5 // pred_fallthru
      _
    %p224 = scmp.lt.s32.totalorder %s13, 2
    // Predicated region
    $region37: #{generator_forward.1} parent=5 // pred_check
      %p225 = pneg %p224
    $region38: #{generator_forward.1} parent=5 // pred_check_branch
      %227 = sbr.rel (%p225) target = $region40
    $region39: #{generator_forward.1} parent=5 // pred_region
      // Predicated region
      $region41: #{generator_forward.1} parent=39 // pred_check
        %p228 = pneg %p33
      $region42: #{generator_forward.1} parent=39 // pred_check_branch
        %230 = sbr.rel (%p228) target = $region44
      $region43: #{generator_forward.1} parent=39 // pred_region
        %s231 = smul.u32 32, %s13
        %p232 = scmp.lt.s32.totalorder %s231, 63
        %s233 = scalar_select %p232, %s231, 63
        %s234 = smul.addr %s233, 8
        %s235 = scalar_lea.vmem %s0, %s234
        %s236 = smul.u32 32, %s13
      $region44: #{generator_forward.1} parent=39 // pred_fallthru
        _
    $region40: #{generator_forward.1} parent=5 // pred_fallthru
      _
    %p237 = scmp.le.s32.totalorder 1, %s13
    %p238 = scmp.lt.s32.totalorder %s13, 3
    %p239 = pnand %p237, %p238
    %p240 = pneg %p239
    // Predicated region
    $region45: #{generator_forward.1} parent=5 // pred_check
      _
    $region46: #{generator_forward.1} parent=5 // pred_check_branch
      %242 = sbr.rel (%p239) target = $region48
    $region47: #{generator_forward.1} parent=5 // pred_region
      %s243 = ssub.s32 %s13, 1
      %s244 = smul.u32 32, %s18
      %p245 = scmp.lt.s32.totalorder %s244, 63
      %s246 = scalar_select %p245, %s244, 63
      %s247 = smul.addr %s246, 8
      %s248 = scalar_lea.vmem %s0, %s247
      %p249 = pneg %p39
      %p250 = pneg %p36
      %p251 = pneg %p60
      %p252 = pneg %p57
      %p253 = pneg %p81
      %p254 = pneg %p78
      %p255 = pneg %p102
      %p256 = pneg %p99
      %p257 = pneg %p123
      %p258 = pneg %p120
      %p259 = pneg %p144
      %p260 = pneg %p141
      %p261 = pneg %p165
      %p262 = pneg %p162
      %p263 = pneg %p191
      %p264 = pneg %p188
      %s265 = smul.u32 32, %s18
      %p266 = scmp.lt.s32.totalorder %s265, 63
      %s267 = scalar_select %p266, %s265, 63
      %s268 = smul.addr %s267, 7
      %s269 = smul.addr %s268, 8
      %s270 = scalar_lea.vmem %s7, %s269
      %s271 = smul.u32 32, %s18
      %p272 = scmp.lt.s32.totalorder %s271, 63
      %s273 = scalar_select %p272, %s271, 63
      %s274 = smul.addr %s273, 8
      %s275 = scalar_lea.vmem %s0, %s274
      %s276 = smul.u32 32, %s18
      %s277 = smul.u32 32, %s18
      %p278 = scmp.lt.s32.totalorder %s277, 63
      %s279 = scalar_select %p278, %s277, 63
      %s280 = smul.addr %s279, 7
      %s281 = smul.addr %s280, 8
      %s282 = scalar_lea.vmem %s7, %s281
      %s283 = smul.u32 32, %s18
      %v284 = vld [vmem:[%s275] sm:$0xff]
      %v285 = vld [vmem:[%s275 + $0x8] sm:$0xff]
      %v286 = vld [vmem:[%s275 + $0x10] sm:$0xff]
      %v287 = vld [vmem:[%s275 + $0x18] sm:$0xff]
      %v288 = vld [vmem:[%s275 + $0x20] sm:$0xff]
      %v289 = vld [vmem:[%s275 + $0x28] sm:$0xff]
      %v290 = vld [vmem:[%s275 + $0x30] sm:$0xff]
      %v291 = vld [vmem:[%s275 + $0x38] sm:$0xff]
      %v292 = vld [vmem:[%s275 + $0x40] sm:$0xff]
      %v293 = vld [vmem:[%s275 + $0x48] sm:$0xff]
      %v294 = vld [vmem:[%s275 + $0x50] sm:$0xff]
      %v295 = vld [vmem:[%s275 + $0x58] sm:$0xff]
      %v296 = vld [vmem:[%s275 + $0x60] sm:$0xff]
      %v297 = vld [vmem:[%s275 + $0x68] sm:$0xff]
      %v298 = vld [vmem:[%s275 + $0x70] sm:$0xff]
      %v299 = vld [vmem:[%s275 + $0x78] sm:$0xff]
      %v300 = vld [vmem:[%s275 + $0x80] sm:$0xff]
      %v301 = vld [vmem:[%s275 + $0x88] sm:$0xff]
      %v302 = vld [vmem:[%s275 + $0x90] sm:$0xff]
      %v303 = vld [vmem:[%s275 + $0x98] sm:$0xff]
      %v304 = vld [vmem:[%s275 + $0xa0] sm:$0xff]
      %v305 = vld [vmem:[%s275 + $0xa8] sm:$0xff]
      %v306 = vld [vmem:[%s275 + $0xb0] sm:$0xff]
      %v307 = vld [vmem:[%s275 + $0xb8] sm:$0xff]
      %v308 = vld [vmem:[%s275 + $0xc0] sm:$0xff]
      %v309 = vld [vmem:[%s275 + $0xc8] sm:$0xff]
      %v310 = vld [vmem:[%s275 + $0xd0] sm:$0xff]
      %v311 = vld [vmem:[%s275 + $0xd8] sm:$0xff]
      %v312 = vld [vmem:[%s275 + $0xe0] sm:$0xff]
      %v313 = vld [vmem:[%s275 + $0xe8] sm:$0xff]
      %v314 = vld [vmem:[%s275 + $0xf0] sm:$0xff]
      %v315 = vld [vmem:[%s275 + $0xf8] sm:$0xff]
      %v316 = vld [vmem:[%s1] sm:$0xff]
      %v317 = vld [vmem:[%s1 + $0x8] sm:$0xff]
      %v318 = vld [vmem:[%s1 + $0x10] sm:$0xff]
      %v319 = vld [vmem:[%s1 + $0x18] sm:$0xff]
      %v320 = vld [vmem:[%s1 + $0x20] sm:$0xff]
      %v321 = vld [vmem:[%s1 + $0x28] sm:$0xff]
      %v322 = vld [vmem:[%s1 + $0x30] sm:$0xff]
      %v323 = vld [vmem:[%s1 + $0x38] sm:$0xff]
      %v324 = vld [vmem:[%s1 + $0x40] sm:$0xff]
      %v325 = vld [vmem:[%s1 + $0x48] sm:$0xff]
      %v326 = vld [vmem:[%s1 + $0x50] sm:$0xff]
      %v327 = vld [vmem:[%s1 + $0x58] sm:$0xff]
      %v328 = vld [vmem:[%s1 + $0x60] sm:$0xf]
      %v329 = vld [vmem:[%s2] sm:$0x1]
      %v331 = vlaneseq
      %v332 = vshrl.u32 %v331, 7
      %v333 = vsub.s32 0, %v332
      %v334 = vrot.slane %v329, %v333
      %vm336 = vcmask 818176
      %v338 = vsel %vm336, %v284, 0
      %v341 = vsel %vm336, %v285, 0
      %v344 = vsel %vm336, %v286, 0
      %v347 = vsel %vm336, %v287, 0
      %v350 = vsel %vm336, %v288, 0
      %v353 = vsel %vm336, %v289, 0
      %v356 = vsel %vm336, %v290, 0
      %v359 = vsel %vm336, %v291, 0
      %v362 = vsel %vm336, %v292, 0
      %v365 = vsel %vm336, %v293, 0
      %v368 = vsel %vm336, %v294, 0
      %v371 = vsel %vm336, %v295, 0
      %v374 = vsel %vm336, %v296, 0
      %v377 = vsel %vm336, %v297, 0
      %v380 = vsel %vm336, %v298, 0
      %v383 = vsel %vm336, %v299, 0
      %v386 = vsel %vm336, %v300, 0
      %v389 = vsel %vm336, %v301, 0
      %v392 = vsel %vm336, %v302, 0
      %v395 = vsel %vm336, %v303, 0
      %v398 = vsel %vm336, %v304, 0
      %v401 = vsel %vm336, %v305, 0
      %v404 = vsel %vm336, %v306, 0
      %v407 = vsel %vm336, %v307, 0
      %v410 = vsel %vm336, %v308, 0
      %v413 = vsel %vm336, %v309, 0
      %v416 = vsel %vm336, %v310, 0
      %v419 = vsel %vm336, %v311, 0
      %v422 = vsel %vm336, %v312, 0
      %v425 = vsel %vm336, %v313, 0
      %v428 = vsel %vm336, %v314, 0
      %v431 = vsel %vm336, %v315, 0
      %vm433 = vcmask 1043456
      %v435 = vsel %vm433, %v328, 0
      %437 = vmatprep.subr.mxu0 0.0
      %438 = vmatpush1.msra.mxu0 %v316
      %439 = vmatprep.subr.mxu0 0.0
      %440 = vmatpush1.msra.mxu0 %v317
      %441 = vmatprep.subr.mxu0 0.0
      %442 = vmatpush1.msra.mxu0 %v318
      %443 = vmatprep.subr.mxu0 0.0
      %444 = vmatpush1.msra.mxu0 %v319
      %445 = vmatprep.subr.mxu0 0.0
      %446 = vmatpush1.msra.mxu0 %v320
      %447 = vmatprep.subr.mxu0 0.0
      %448 = vmatpush1.msra.mxu0 %v321
      %449 = vmatprep.subr.mxu0 0.0
      %450 = vmatpush1.msra.mxu0 %v322
      %451 = vmatprep.subr.mxu0 0.0
      %452 = vmatpush1.msra.mxu0 %v323
      %453 = vmatprep.subr.mxu0 0.0
      %454 = vmatpush1.msra.mxu0 %v324
      %455 = vmatprep.subr.mxu0 0.0
      %456 = vmatpush1.msra.mxu0 %v325
      %457 = vmatprep.subr.mxu0 0.0
      %458 = vmatpush1.msra.mxu0 %v326
      %459 = vmatprep.subr.mxu0 0.0
      %460 = vmatpush1.msra.mxu0 %v327
      %461 = vmatprep.subr.mxu0 0.0
      %462 = vmatpush1.msra.mxu0 %v435
      %463 = vmatprep.subr.mxu0 0.0
      %464 = vmatpush1.msra.mxu0 0.0
      %465 = vmatprep.subr.mxu0 0.0
      %466 = vmatpush1.msra.mxu0 0.0
      %467 = vmatprep.subr.mxu0 0.0
      %468 = vmatpush1.msra.mxu0 0.0
      %469 = vmatprep.subr.mxu0 0.0
      %470 = vmatpush1.msra.mxu0 0.0
      %471 = vmatprep.subr.mxu0 0.0
      %472 = vmatpush1.msra.mxu0 0.0
      %473 = vmatprep.subr.mxu0 0.0
      %474 = vmatpush1.msra.mxu0 0.0
      %475 = vmatprep.subr.mxu0 0.0
      %476 = vmatpush1.msra.mxu0 0.0
      %477 = vmatprep.subr.mxu0 0.0
      %478 = vmatpush1.msra.mxu0 0.0
      %479 = vmatprep.subr.mxu0 0.0
      %480 = vmatpush1.msra.mxu0 0.0
      %481 = vmatprep.subr.mxu0 0.0
      %482 = vmatpush1.msra.mxu0 0.0
      %483 = vmatprep.subr.mxu0 0.0
      %484 = vmatpush1.msra.mxu0 0.0
      %485 = vmatprep.subr.mxu0 0.0
      %486 = vmatpush1.msra.mxu0 0.0
      %487 = vmatprep.subr.mxu0 0.0
      %488 = vmatpush1.msra.mxu0 0.0
      %489 = vmatprep.subr.mxu0 0.0
      %490 = vmatpush1.msra.mxu0 0.0
      %491 = vmatprep.subr.mxu0 0.0
      %492 = vmatpush1.msra.mxu0 0.0
      %493 = vmatprep.subr.mxu0 0.0
      %494 = vmatpush1.msra.mxu0 0.0
      %495 = vmatprep.subr.mxu0 0.0
      %496 = vmatpush1.msra.mxu0 0.0
      %497 = vmatprep.subr.mxu0 0.0
      %498 = vmatpush1.msra.mxu0 0.0
      %499 = vmatprep.subr.mxu0 0.0
      %500 = vmatpush1.msra.mxu0 0.0
      %501 = vmatprep.mubr.f32.mxu0 0.0
      %502 = vmatmul.mubr.f32.gmra.mrb[0].mxu0 %v338
      %v503 = vpop.f32.mrb[0].mxu0
      %v504 = vadd.f32 %v334, %v503
      %v505 = vpop.f32.mrb[0].mxu0
      %506 = vmatprep.mubr.f32.mxu0 0.0
      %507 = vmatmul.mubr.f32.gmra.mrb[0].mxu0 %v341
      %v508 = vpop.f32.mrb[0].mxu0
      %v509 = vadd.f32 %v334, %v508
      %v510 = vpop.f32.mrb[0].mxu0
      %511 = vmatprep.mubr.f32.mxu0 0.0
      %512 = vmatmul.mubr.f32.gmra.mrb[0].mxu0 %v344
      %v513 = vpop.f32.mrb[0].mxu0
      %v514 = vadd.f32 %v334, %v513
      %v515 = vpop.f32.mrb[0].mxu0
      %516 = vmatprep.mubr.f32.mxu0 0.0
      %517 = vmatmul.mubr.f32.gmra.mrb[0].mxu0 %v347
      %v518 = vpop.f32.mrb[0].mxu0
      %v519 = vadd.f32 %v334, %v518
      %v520 = vpop.f32.mrb[0].mxu0
      %521 = vmatprep.mubr.f32.mxu0 0.0
      %522 = vmatmul.mubr.f32.gmra.mrb[0].mxu0 %v350
      %v523 = vpop.f32.mrb[0].mxu0
      %v524 = vadd.f32 %v334, %v523
      %v525 = vpop.f32.mrb[0].mxu0
      %526 = vmatprep.mubr.f32.mxu0 0.0
      %527 = vmatmul.mubr.f32.gmra.mrb[0].mxu0 %v353
      %v528 = vpop.f32.mrb[0].mxu0
      %v529 = vadd.f32 %v334, %v528
      %v530 = vpop.f32.mrb[0].mxu0
      %531 = vmatprep.mubr.f32.mxu0 0.0
      %532 = vmatmul.mubr.f32.gmra.mrb[0].mxu0 %v356
      %v533 = vpop.f32.mrb[0].mxu0
      %v534 = vadd.f32 %v334, %v533
      %v535 = vpop.f32.mrb[0].mxu0
      %536 = vmatprep.mubr.f32.mxu0 0.0
      %537 = vmatmul.mubr.f32.gmra.mrb[0].mxu0 %v359
      %v538 = vpop.f32.mrb[0].mxu0
      %v539 = vadd.f32 %v334, %v538
      %v540 = vpop.f32.mrb[0].mxu0
      %541 = vmatprep.mubr.f32.mxu0 0.0
      %542 = vmatmul.mubr.f32.gmra.mrb[0].mxu0 %v362
      %v543 = vpop.f32.mrb[0].mxu0
      %v544 = vadd.f32 %v334, %v543
      %v545 = vpop.f32.mrb[0].mxu0
      %546 = vmatprep.mubr.f32.mxu0 0.0
      %547 = vmatmul.mubr.f32.gmra.mrb[0].mxu0 %v365
      %v548 = vpop.f32.mrb[0].mxu0
      %v549 = vadd.f32 %v334, %v548
      %v550 = vpop.f32.mrb[0].mxu0
      %551 = vmatprep.mubr.f32.mxu0 0.0
      %552 = vmatmul.mubr.f32.gmra.mrb[0].mxu0 %v368
      %v553 = vpop.f32.mrb[0].mxu0
      %v554 = vadd.f32 %v334, %v553
      %v555 = vpop.f32.mrb[0].mxu0
      %556 = vmatprep.mubr.f32.mxu0 0.0
      %557 = vmatmul.mubr.f32.gmra.mrb[0].mxu0 %v371
      %v558 = vpop.f32.mrb[0].mxu0
      %v559 = vadd.f32 %v334, %v558
      %v560 = vpop.f32.mrb[0].mxu0
      %561 = vmatprep.mubr.f32.mxu0 0.0
      %562 = vmatmul.mubr.f32.gmra.mrb[0].mxu0 %v374
      %v563 = vpop.f32.mrb[0].mxu0
      %v564 = vadd.f32 %v334, %v563
      %v565 = vpop.f32.mrb[0].mxu0
      %566 = vmatprep.mubr.f32.mxu0 0.0
      %567 = vmatmul.mubr.f32.gmra.mrb[0].mxu0 %v377
      %v568 = vpop.f32.mrb[0].mxu0
      %v569 = vadd.f32 %v334, %v568
      %v570 = vpop.f32.mrb[0].mxu0
      %571 = vmatprep.mubr.f32.mxu0 0.0
      %572 = vmatmul.mubr.f32.gmra.mrb[0].mxu0 %v380
      %v573 = vpop.f32.mrb[0].mxu0
      %v574 = vadd.f32 %v334, %v573
      %v575 = vpop.f32.mrb[0].mxu0
      %576 = vmatprep.mubr.f32.mxu0 0.0
      %577 = vmatmul.mubr.f32.gmra.mrb[0].mxu0 %v383
      %v578 = vpop.f32.mrb[0].mxu0
      %v579 = vadd.f32 %v334, %v578
      %v580 = vpop.f32.mrb[0].mxu0
      %581 = vmatprep.mubr.f32.mxu0 0.0
      %582 = vmatmul.mubr.f32.gmra.mrb[0].mxu0 %v386
      %v583 = vpop.f32.mrb[0].mxu0
      %v584 = vadd.f32 %v334, %v583
      %v585 = vpop.f32.mrb[0].mxu0
      %586 = vmatprep.mubr.f32.mxu0 0.0
      %587 = vmatmul.mubr.f32.gmra.mrb[0].mxu0 %v389
      %v588 = vpop.f32.mrb[0].mxu0
      %v589 = vadd.f32 %v334, %v588
      %v590 = vpop.f32.mrb[0].mxu0
      %591 = vmatprep.mubr.f32.mxu0 0.0
      %592 = vmatmul.mubr.f32.gmra.mrb[0].mxu0 %v392
      %v593 = vpop.f32.mrb[0].mxu0
      %v594 = vadd.f32 %v334, %v593
      %v595 = vpop.f32.mrb[0].mxu0
      %596 = vmatprep.mubr.f32.mxu0 0.0
      %597 = vmatmul.mubr.f32.gmra.mrb[0].mxu0 %v395
      %v598 = vpop.f32.mrb[0].mxu0
      %v599 = vadd.f32 %v334, %v598
      %v600 = vpop.f32.mrb[0].mxu0
      %601 = vmatprep.mubr.f32.mxu0 0.0
      %602 = vmatmul.mubr.f32.gmra.mrb[0].mxu0 %v398
      %v603 = vpop.f32.mrb[0].mxu0
      %v604 = vadd.f32 %v334, %v603
      %v605 = vpop.f32.mrb[0].mxu0
      %606 = vmatprep.mubr.f32.mxu0 0.0
      %607 = vmatmul.mubr.f32.gmra.mrb[0].mxu0 %v401
      %v608 = vpop.f32.mrb[0].mxu0
      %v609 = vadd.f32 %v334, %v608
      %v610 = vpop.f32.mrb[0].mxu0
      %611 = vmatprep.mubr.f32.mxu0 0.0
      %612 = vmatmul.mubr.f32.gmra.mrb[0].mxu0 %v404
      %v613 = vpop.f32.mrb[0].mxu0
      %v614 = vadd.f32 %v334, %v613
      %v615 = vpop.f32.mrb[0].mxu0
      %616 = vmatprep.mubr.f32.mxu0 0.0
      %617 = vmatmul.mubr.f32.gmra.mrb[0].mxu0 %v407
      %v618 = vpop.f32.mrb[0].mxu0
      %v619 = vadd.f32 %v334, %v618
      %v620 = vpop.f32.mrb[0].mxu0
      %621 = vmatprep.mubr.f32.mxu0 0.0
      %622 = vmatmul.mubr.f32.gmra.mrb[0].mxu0 %v410
      %v623 = vpop.f32.mrb[0].mxu0
      %v624 = vadd.f32 %v334, %v623
      %v625 = vpop.f32.mrb[0].mxu0
      %626 = vmatprep.mubr.f32.mxu0 0.0
      %627 = vmatmul.mubr.f32.gmra.mrb[0].mxu0 %v413
      %v628 = vpop.f32.mrb[0].mxu0
      %v629 = vadd.f32 %v334, %v628
      %v630 = vpop.f32.mrb[0].mxu0
      %631 = vmatprep.mubr.f32.mxu0 0.0
      %632 = vmatmul.mubr.f32.gmra.mrb[0].mxu0 %v416
      %v633 = vpop.f32.mrb[0].mxu0
      %v634 = vadd.f32 %v334, %v633
      %v635 = vpop.f32.mrb[0].mxu0
      %636 = vmatprep.mubr.f32.mxu0 0.0
      %637 = vmatmul.mubr.f32.gmra.mrb[0].mxu0 %v419
      %v638 = vpop.f32.mrb[0].mxu0
      %v639 = vadd.f32 %v334, %v638
      %v640 = vpop.f32.mrb[0].mxu0
      %641 = vmatprep.mubr.f32.mxu0 0.0
      %642 = vmatmul.mubr.f32.gmra.mrb[0].mxu0 %v422
      %v643 = vpop.f32.mrb[0].mxu0
      %v644 = vadd.f32 %v334, %v643
      %v645 = vpop.f32.mrb[0].mxu0
      %646 = vmatprep.mubr.f32.mxu0 0.0
      %647 = vmatmul.mubr.f32.gmra.mrb[0].mxu0 %v425
      %v648 = vpop.f32.mrb[0].mxu0
      %v649 = vadd.f32 %v334, %v648
      %v650 = vpop.f32.mrb[0].mxu0
      %651 = vmatprep.mubr.f32.mxu0 0.0
      %652 = vmatmul.mubr.f32.gmra.mrb[0].mxu0 %v428
      %v653 = vpop.f32.mrb[0].mxu0
      %v654 = vadd.f32 %v334, %v653
      %v655 = vpop.f32.mrb[0].mxu0
      %656 = vmatprep.mubr.f32.mxu0 0.0
      %657 = vmatmul.mubr.f32.gmra.mrb[0].mxu0 %v431
      %v658 = vpop.f32.mrb[0].mxu0
      %v659 = vadd.f32 %v334, %v658
      %v660 = vpop.f32.mrb[0].mxu0
      %661 = vdwg.mxu0
      %v662 = vmul.f32 %v504, 0.2
      %v663 = vmul.f32 %v509, 0.2
      %v664 = vmul.f32 %v514, 0.2
      %v665 = vmul.f32 %v519, 0.2
      %v666 = vmul.f32 %v524, 0.2
      %v667 = vmul.f32 %v529, 0.2
      %v668 = vmul.f32 %v534, 0.2
      %v669 = vmul.f32 %v539, 0.2
      %v670 = vmul.f32 %v544, 0.2
      %v671 = vmul.f32 %v549, 0.2
      %v672 = vmul.f32 %v554, 0.2
      %v673 = vmul.f32 %v559, 0.2
      %v674 = vmul.f32 %v564, 0.2
      %v675 = vmul.f32 %v569, 0.2
      %v676 = vmul.f32 %v574, 0.2
      %v677 = vmul.f32 %v579, 0.2
      %v678 = vmul.f32 %v584, 0.2
      %v679 = vmul.f32 %v589, 0.2
      %v680 = vmul.f32 %v594, 0.2
      %v681 = vmul.f32 %v599, 0.2
      %v682 = vmul.f32 %v604, 0.2
      %v683 = vmul.f32 %v609, 0.2
      %v684 = vmul.f32 %v614, 0.2
      %v685 = vmul.f32 %v619, 0.2
      %v686 = vmul.f32 %v624, 0.2
      %v687 = vmul.f32 %v629, 0.2
      %v688 = vmul.f32 %v634, 0.2
      %v689 = vmul.f32 %v639, 0.2
      %v690 = vmul.f32 %v644, 0.2
      %v691 = vmul.f32 %v649, 0.2
      %v692 = vmul.f32 %v654, 0.2
      %v693 = vmul.f32 %v659, 0.2
      %v694 = vmax.f32 %v504, %v662
      %v695 = vmax.f32 %v509, %v663
      %v696 = vmax.f32 %v514, %v664
      %v697 = vmax.f32 %v519, %v665
      %v698 = vmax.f32 %v524, %v666
      %v699 = vmax.f32 %v529, %v667
      %v700 = vmax.f32 %v534, %v668
      %v701 = vmax.f32 %v539, %v669
      %v702 = vmax.f32 %v544, %v670
      %v703 = vmax.f32 %v549, %v671
      %v704 = vmax.f32 %v554, %v672
      %v705 = vmax.f32 %v559, %v673
      %v706 = vmax.f32 %v564, %v674
      %v707 = vmax.f32 %v569, %v675
      %v708 = vmax.f32 %v574, %v676
      %v709 = vmax.f32 %v579, %v677
      %v710 = vmax.f32 %v584, %v678
      %v711 = vmax.f32 %v589, %v679
      %v712 = vmax.f32 %v594, %v680
      %v713 = vmax.f32 %v599, %v681
      %v714 = vmax.f32 %v604, %v682
      %v715 = vmax.f32 %v609, %v683
      %v716 = vmax.f32 %v614, %v684
      %v717 = vmax.f32 %v619, %v685
      %v718 = vmax.f32 %v624, %v686
      %v719 = vmax.f32 %v629, %v687
      %v720 = vmax.f32 %v634, %v688
      %v721 = vmax.f32 %v639, %v689
      %v722 = vmax.f32 %v644, %v690
      %v723 = vmax.f32 %v649, %v691
      %v724 = vmax.f32 %v654, %v692
      %v725 = vmax.f32 %v659, %v693
      %v726 = vld [vmem:[%s3] sm:$0xff]
      %v727 = vld [vmem:[%s3 + $0x8] sm:$0xff]
      %v728 = vld [vmem:[%s3 + $0x10] sm:$0xff]
      %v729 = vld [vmem:[%s3 + $0x18] sm:$0xff]
      %v730 = vld [vmem:[%s3 + $0x20] sm:$0xff]
      %v731 = vld [vmem:[%s3 + $0x28] sm:$0xff]
      %v732 = vld [vmem:[%s3 + $0x30] sm:$0xff]
      %v733 = vld [vmem:[%s3 + $0x38] sm:$0xff]
      %v734 = vld [vmem:[%s3 + $0x40] sm:$0xff]
      %v735 = vld [vmem:[%s3 + $0x48] sm:$0xff]
      %v736 = vld [vmem:[%s3 + $0x50] sm:$0xff]
      %v737 = vld [vmem:[%s3 + $0x58] sm:$0xff]
      %v738 = vld [vmem:[%s3 + $0x60] sm:$0xff]
      %v739 = vld [vmem:[%s3 + $0x68] sm:$0xff]
      %v740 = vld [vmem:[%s3 + $0x70] sm:$0xff]
      %v741 = vld [vmem:[%s3 + $0x78] sm:$0xff]
      %v742 = vld [vmem:[%s3 + $0x80] sm:$0xff]
      %v743 = vld [vmem:[%s3 + $0x88] sm:$0xff]
      %v744 = vld [vmem:[%s3 + $0x90] sm:$0xff]
      %v745 = vld [vmem:[%s3 + $0x98] sm:$0xff]
      %v746 = vld [vmem:[%s3 + $0xa0] sm:$0xff]
      %v747 = vld [vmem:[%s3 + $0xa8] sm:$0xff]
      %v748 = vld [vmem:[%s3 + $0xb0] sm:$0xff]
      %v749 = vld [vmem:[%s3 + $0xb8] sm:$0xff]
      %v750 = vld [vmem:[%s3 + $0xc0] sm:$0xff]
      %v751 = vld [vmem:[%s3 + $0xc8] sm:$0xff]
      %v752 = vld [vmem:[%s3 + $0xd0] sm:$0xff]
      %v753 = vld [vmem:[%s3 + $0xd8] sm:$0xff]
      %v754 = vld [vmem:[%s3 + $0xe0] sm:$0xff]
      %v755 = vld [vmem:[%s3 + $0xe8] sm:$0xff]
      %v756 = vld [vmem:[%s3 + $0xf0] sm:$0xff]
      %v757 = vld [vmem:[%s3 + $0xf8] sm:$0xff]
      %v758 = vld [vmem:[%s4] sm:$0x3]
      %v760 = vlaneseq
      %v761 = vshrl.u32 %v760, 7
      %v762 = vsub.s32 0, %v761
      %v763 = vrot.slane %v758, %v762
      %v764 = vlaneseq
      %v765 = vshrl.u32 %v764, 7
      %v766 = vsub.s32 1, %v765
      %v767 = vrot.slane %v758, %v766
      %770 = vmatprep.subr.mxu0 %v727
      %771 = vmatpush1.msra.mxu0 %v726
      %772 = vmatprep.subr.mxu0 %v729
      %773 = vmatpush1.msra.mxu0 %v728
      %774 = vmatprep.subr.mxu0 %v731
      %775 = vmatpush1.msra.mxu0 %v730
      %776 = vmatprep.subr.mxu0 %v733
      %777 = vmatpush1.msra.mxu0 %v732
      %778 = vmatprep.subr.mxu0 %v735
      %779 = vmatpush1.msra.mxu0 %v734
      %780 = vmatprep.subr.mxu0 %v737
      %781 = vmatpush1.msra.mxu0 %v736
      %782 = vmatprep.subr.mxu0 %v739
      %783 = vmatpush1.msra.mxu0 %v738
      %784 = vmatprep.subr.mxu0 %v741
      %785 = vmatpush1.msra.mxu0 %v740
      %786 = vmatprep.subr.mxu0 %v743
      %787 = vmatpush1.msra.mxu0 %v742
      %788 = vmatprep.subr.mxu0 %v745
      %789 = vmatpush1.msra.mxu0 %v744
      %790 = vmatprep.subr.mxu0 %v747
      %791 = vmatpush1.msra.mxu0 %v746
      %792 = vmatprep.subr.mxu0 %v749
      %793 = vmatpush1.msra.mxu0 %v748
      %794 = vmatprep.subr.mxu0 %v751
      %795 = vmatpush1.msra.mxu0 %v750
      %796 = vmatprep.subr.mxu0 %v753
      %797 = vmatpush1.msra.mxu0 %v752
      %798 = vmatprep.subr.mxu0 %v755
      %799 = vmatpush1.msra.mxu0 %v754
      %800 = vmatprep.subr.mxu0 %v757
      %801 = vmatpush1.msra.mxu0 %v756
      %802 = vmatprep.subr.mxu0 0.0
      %803 = vmatpush1.msra.mxu0 0.0
      %804 = vmatprep.subr.mxu0 0.0
      %805 = vmatpush1.msra.mxu0 0.0
      %806 = vmatprep.subr.mxu0 0.0
      %807 = vmatpush1.msra.mxu0 0.0
      %808 = vmatprep.subr.mxu0 0.0
      %809 = vmatpush1.msra.mxu0 0.0
      %810 = vmatprep.subr.mxu0 0.0
      %811 = vmatpush1.msra.mxu0 0.0
      %812 = vmatprep.subr.mxu0 0.0
      %813 = vmatpush1.msra.mxu0 0.0
      %814 = vmatprep.subr.mxu0 0.0
      %815 = vmatpush1.msra.mxu0 0.0
      %816 = vmatprep.subr.mxu0 0.0
      %817 = vmatpush1.msra.mxu0 0.0
      %818 = vmatprep.subr.mxu0 0.0
      %819 = vmatpush1.msra.mxu0 0.0
      %820 = vmatprep.subr.mxu0 0.0
      %821 = vmatpush1.msra.mxu0 0.0
      %822 = vmatprep.subr.mxu0 0.0
      %823 = vmatpush1.msra.mxu0 0.0
      %824 = vmatprep.subr.mxu0 0.0
      %825 = vmatpush1.msra.mxu0 0.0
      %826 = vmatprep.subr.mxu0 0.0
      %827 = vmatpush1.msra.mxu0 0.0
      %828 = vmatprep.subr.mxu0 0.0
      %829 = vmatpush1.msra.mxu0 0.0
      %830 = vmatprep.subr.mxu0 0.0
      %831 = vmatpush1.msra.mxu0 0.0
      %832 = vmatprep.subr.mxu0 0.0
      %833 = vmatpush1.msra.mxu0 0.0
      %834 = vmatprep.mubr.f32.mxu0 0.0
      %835 = vmatmul.mubr.f32.gmra.mrb[0].mxu0 %v694
      %v836 = vpop.f32.mrb[0].mxu0
      %v837 = vadd.f32 %v763, %v836
      %v838 = vpop.f32.mrb[0].mxu0
      %v839 = vadd.f32 %v767, %v838
      %840 = vmatprep.mubr.f32.mxu0 0.0
      %841 = vmatmul.mubr.f32.gmra.mrb[0].mxu0 %v695
      %v842 = vpop.f32.mrb[0].mxu0
      %v843 = vadd.f32 %v763, %v842
      %v844 = vpop.f32.mrb[0].mxu0
      %v845 = vadd.f32 %v767, %v844
      %846 = vmatprep.mubr.f32.mxu0 0.0
      %847 = vmatmul.mubr.f32.gmra.mrb[0].mxu0 %v696
      %v848 = vpop.f32.mrb[0].mxu0
      %v849 = vadd.f32 %v763, %v848
      %v850 = vpop.f32.mrb[0].mxu0
      %v851 = vadd.f32 %v767, %v850
      %852 = vmatprep.mubr.f32.mxu0 0.0
      %853 = vmatmul.mubr.f32.gmra.mrb[0].mxu0 %v697
      %v854 = vpop.f32.mrb[0].mxu0
      %v855 = vadd.f32 %v763, %v854
      %v856 = vpop.f32.mrb[0].mxu0
      %v857 = vadd.f32 %v767, %v856
      %858 = vmatprep.mubr.f32.mxu0 0.0
      %859 = vmatmul.mubr.f32.gmra.mrb[0].mxu0 %v698
      %v860 = vpop.f32.mrb[0].mxu0
      %v861 = vadd.f32 %v763, %v860
      %v862 = vpop.f32.mrb[0].mxu0
      %v863 = vadd.f32 %v767, %v862
      %864 = vmatprep.mubr.f32.mxu0 0.0
      %865 = vmatmul.mubr.f32.gmra.mrb[0].mxu0 %v699
      %v866 = vpop.f32.mrb[0].mxu0
      %v867 = vadd.f32 %v763, %v866
      %v868 = vpop.f32.mrb[0].mxu0
      %v869 = vadd.f32 %v767, %v868
      %870 = vmatprep.mubr.f32.mxu0 0.0
      %871 = vmatmul.mubr.f32.gmra.mrb[0].mxu0 %v700
      %v872 = vpop.f32.mrb[0].mxu0
      %v873 = vadd.f32 %v763, %v872
      %v874 = vpop.f32.mrb[0].mxu0
      %v875 = vadd.f32 %v767, %v874
      %876 = vmatprep.mubr.f32.mxu0 0.0
      %877 = vmatmul.mubr.f32.gmra.mrb[0].mxu0 %v701
      %v878 = vpop.f32.mrb[0].mxu0
      %v879 = vadd.f32 %v763, %v878
      %v880 = vpop.f32.mrb[0].mxu0
      %v881 = vadd.f32 %v767, %v880
      %882 = vmatprep.mubr.f32.mxu0 0.0
      %883 = vmatmul.mubr.f32.gmra.mrb[0].mxu0 %v702
      %v884 = vpop.f32.mrb[0].mxu0
      %v885 = vadd.f32 %v763, %v884
      %v886 = vpop.f32.mrb[0].mxu0
      %v887 = vadd.f32 %v767, %v886
      %888 = vmatprep.mubr.f32.mxu0 0.0
      %889 = vmatmul.mubr.f32.gmra.mrb[0].mxu0 %v703
      %v890 = vpop.f32.mrb[0].mxu0
      %v891 = vadd.f32 %v763, %v890
      %v892 = vpop.f32.mrb[0].mxu0
      %v893 = vadd.f32 %v767, %v892
      %894 = vmatprep.mubr.f32.mxu0 0.0
      %895 = vmatmul.mubr.f32.gmra.mrb[0].mxu0 %v704
      %v896 = vpop.f32.mrb[0].mxu0
      %v897 = vadd.f32 %v763, %v896
      %v898 = vpop.f32.mrb[0].mxu0
      %v899 = vadd.f32 %v767, %v898
      %900 = vmatprep.mubr.f32.mxu0 0.0
      %901 = vmatmul.mubr.f32.gmra.mrb[0].mxu0 %v705
      %v902 = vpop.f32.mrb[0].mxu0
      %v903 = vadd.f32 %v763, %v902
      %v904 = vpop.f32.mrb[0].mxu0
      %v905 = vadd.f32 %v767, %v904
      %906 = vmatprep.mubr.f32.mxu0 0.0
      %907 = vmatmul.mubr.f32.gmra.mrb[0].mxu0 %v706
      %v908 = vpop.f32.mrb[0].mxu0
      %v909 = vadd.f32 %v763, %v908
      %v910 = vpop.f32.mrb[0].mxu0
      %v911 = vadd.f32 %v767, %v910
      %912 = vmatprep.mubr.f32.mxu0 0.0
      %913 = vmatmul.mubr.f32.gmra.mrb[0].mxu0 %v707
      %v914 = vpop.f32.mrb[0].mxu0
      %v915 = vadd.f32 %v763, %v914
      %v916 = vpop.f32.mrb[0].mxu0
      %v917 = vadd.f32 %v767, %v916
      %918 = vmatprep.mubr.f32.mxu0 0.0
      %919 = vmatmul.mubr.f32.gmra.mrb[0].mxu0 %v708
      %v920 = vpop.f32.mrb[0].mxu0
      %v921 = vadd.f32 %v763, %v920
      %v922 = vpop.f32.mrb[0].mxu0
      %v923 = vadd.f32 %v767, %v922
      %924 = vmatprep.mubr.f32.mxu0 0.0
      %925 = vmatmul.mubr.f32.gmra.mrb[0].mxu0 %v709
      %v926 = vpop.f32.mrb[0].mxu0
      %v927 = vadd.f32 %v763, %v926
      %v928 = vpop.f32.mrb[0].mxu0
      %v929 = vadd.f32 %v767, %v928
      %930 = vmatprep.mubr.f32.mxu0 0.0
      %931 = vmatmul.mubr.f32.gmra.mrb[0].mxu0 %v710
      %v932 = vpop.f32.mrb[0].mxu0
      %v933 = vadd.f32 %v763, %v932
      %v934 = vpop.f32.mrb[0].mxu0
      %v935 = vadd.f32 %v767, %v934
      %936 = vmatprep.mubr.f32.mxu0 0.0
      %937 = vmatmul.mubr.f32.gmra.mrb[0].mxu0 %v711
      %v938 = vpop.f32.mrb[0].mxu0
      %v939 = vadd.f32 %v763, %v938
      %v940 = vpop.f32.mrb[0].mxu0
      %v941 = vadd.f32 %v767, %v940
      %942 = vmatprep.mubr.f32.mxu0 0.0
      %943 = vmatmul.mubr.f32.gmra.mrb[0].mxu0 %v712
      %v944 = vpop.f32.mrb[0].mxu0
      %v945 = vadd.f32 %v763, %v944
      %v946 = vpop.f32.mrb[0].mxu0
      %v947 = vadd.f32 %v767, %v946
      %948 = vmatprep.mubr.f32.mxu0 0.0
      %949 = vmatmul.mubr.f32.gmra.mrb[0].mxu0 %v713
      %v950 = vpop.f32.mrb[0].mxu0
      %v951 = vadd.f32 %v763, %v950
      %v952 = vpop.f32.mrb[0].mxu0
      %v953 = vadd.f32 %v767, %v952
      %954 = vmatprep.mubr.f32.mxu0 0.0
      %955 = vmatmul.mubr.f32.gmra.mrb[0].mxu0 %v714
      %v956 = vpop.f32.mrb[0].mxu0
      %v957 = vadd.f32 %v763, %v956
      %v958 = vpop.f32.mrb[0].mxu0
      %v959 = vadd.f32 %v767, %v958
      %960 = vmatprep.mubr.f32.mxu0 0.0
      %961 = vmatmul.mubr.f32.gmra.mrb[0].mxu0 %v715
      %v962 = vpop.f32.mrb[0].mxu0
      %v963 = vadd.f32 %v763, %v962
      %v964 = vpop.f32.mrb[0].mxu0
      %v965 = vadd.f32 %v767, %v964
      %966 = vmatprep.mubr.f32.mxu0 0.0
      %967 = vmatmul.mubr.f32.gmra.mrb[0].mxu0 %v716
      %v968 = vpop.f32.mrb[0].mxu0
      %v969 = vadd.f32 %v763, %v968
      %v970 = vpop.f32.mrb[0].mxu0
      %v971 = vadd.f32 %v767, %v970
      %972 = vmatprep.mubr.f32.mxu0 0.0
      %973 = vmatmul.mubr.f32.gmra.mrb[0].mxu0 %v717
      %v974 = vpop.f32.mrb[0].mxu0
      %v975 = vadd.f32 %v763, %v974
      %v976 = vpop.f32.mrb[0].mxu0
      %v977 = vadd.f32 %v767, %v976
      %978 = vmatprep.mubr.f32.mxu0 0.0
      %979 = vmatmul.mubr.f32.gmra.mrb[0].mxu0 %v718
      %v980 = vpop.f32.mrb[0].mxu0
      %v981 = vadd.f32 %v763, %v980
      %v982 = vpop.f32.mrb[0].mxu0
      %v983 = vadd.f32 %v767, %v982
      %984 = vmatprep.mubr.f32.mxu0 0.0
      %985 = vmatmul.mubr.f32.gmra.mrb[0].mxu0 %v719
      %v986 = vpop.f32.mrb[0].mxu0
      %v987 = vadd.f32 %v763, %v986
      %v988 = vpop.f32.mrb[0].mxu0
      %v989 = vadd.f32 %v767, %v988
      %990 = vmatprep.mubr.f32.mxu0 0.0
      %991 = vmatmul.mubr.f32.gmra.mrb[0].mxu0 %v720
      %v992 = vpop.f32.mrb[0].mxu0
      %v993 = vadd.f32 %v763, %v992
      %v994 = vpop.f32.mrb[0].mxu0
      %v995 = vadd.f32 %v767, %v994
      %996 = vmatprep.mubr.f32.mxu0 0.0
      %997 = vmatmul.mubr.f32.gmra.mrb[0].mxu0 %v721
      %v998 = vpop.f32.mrb[0].mxu0
      %v999 = vadd.f32 %v763, %v998
      %v1000 = vpop.f32.mrb[0].mxu0
      %v1001 = vadd.f32 %v767, %v1000
      %1002 = vmatprep.mubr.f32.mxu0 0.0
      %1003 = vmatmul.mubr.f32.gmra.mrb[0].mxu0 %v722
      %v1004 = vpop.f32.mrb[0].mxu0
      %v1005 = vadd.f32 %v763, %v1004
      %v1006 = vpop.f32.mrb[0].mxu0
      %v1007 = vadd.f32 %v767, %v1006
      %1008 = vmatprep.mubr.f32.mxu0 0.0
      %1009 = vmatmul.mubr.f32.gmra.mrb[0].mxu0 %v723
      %v1010 = vpop.f32.mrb[0].mxu0
      %v1011 = vadd.f32 %v763, %v1010
      %v1012 = vpop.f32.mrb[0].mxu0
      %v1013 = vadd.f32 %v767, %v1012
      %1014 = vmatprep.mubr.f32.mxu0 0.0
      %1015 = vmatmul.mubr.f32.gmra.mrb[0].mxu0 %v724
      %v1016 = vpop.f32.mrb[0].mxu0
      %v1017 = vadd.f32 %v763, %v1016
      %v1018 = vpop.f32.mrb[0].mxu0
      %v1019 = vadd.f32 %v767, %v1018
      %1020 = vmatprep.mubr.f32.mxu0 0.0
      %1021 = vmatmul.mubr.f32.gmra.mrb[0].mxu0 %v725
      %v1022 = vpop.f32.mrb[0].mxu0
      %v1023 = vadd.f32 %v763, %v1022
      %v1024 = vpop.f32.mrb[0].mxu0
      %v1025 = vadd.f32 %v767, %v1024
      %1026 = vdwg.mxu0
      %v1027 = vmul.f32 %v837, 0.2
      %v1028 = vmul.f32 %v839, 0.2
      %v1029 = vmul.f32 %v843, 0.2
      %v1030 = vmul.f32 %v845, 0.2
      %v1031 = vmul.f32 %v849, 0.2
      %v1032 = vmul.f32 %v851, 0.2
      %v1033 = vmul.f32 %v855, 0.2
      %v1034 = vmul.f32 %v857, 0.2
      %v1035 = vmul.f32 %v861, 0.2
      %v1036 = vmul.f32 %v863, 0.2
      %v1037 = vmul.f32 %v867, 0.2
      %v1038 = vmul.f32 %v869, 0.2
      %v1039 = vmul.f32 %v873, 0.2
      %v1040 = vmul.f32 %v875, 0.2
      %v1041 = vmul.f32 %v879, 0.2
      %v1042 = vmul.f32 %v881, 0.2
      %v1043 = vmul.f32 %v885, 0.2
      %v1044 = vmul.f32 %v887, 0.2
      %v1045 = vmul.f32 %v891, 0.2
      %v1046 = vmul.f32 %v893, 0.2
      %v1047 = vmul.f32 %v897, 0.2
      %v1048 = vmul.f32 %v899, 0.2
      %v1049 = vmul.f32 %v903, 0.2
      %v1050 = vmul.f32 %v905, 0.2
      %v1051 = vmul.f32 %v909, 0.2
      %v1052 = vmul.f32 %v911, 0.2
      %v1053 = vmul.f32 %v915, 0.2
      %v1054 = vmul.f32 %v917, 0.2
      %v1055 = vmul.f32 %v921, 0.2
      %v1056 = vmul.f32 %v923, 0.2
      %v1057 = vmul.f32 %v927, 0.2
      %v1058 = vmul.f32 %v929, 0.2
      %v1059 = vmul.f32 %v933, 0.2
      %v1060 = vmul.f32 %v935, 0.2
      %v1061 = vmul.f32 %v939, 0.2
      %v1062 = vmul.f32 %v941, 0.2
      %v1063 = vmul.f32 %v945, 0.2
      %v1064 = vmul.f32 %v947, 0.2
      %v1065 = vmul.f32 %v951, 0.2
      %v1066 = vmul.f32 %v953, 0.2
      %v1067 = vmul.f32 %v957, 0.2
      %v1068 = vmul.f32 %v959, 0.2
      %v1069 = vmul.f32 %v963, 0.2
      %v1070 = vmul.f32 %v965, 0.2
      %v1071 = vmul.f32 %v969, 0.2
      %v1072 = vmul.f32 %v971, 0.2
      %v1073 = vmul.f32 %v975, 0.2
      %v1074 = vmul.f32 %v977, 0.2
      %v1075 = vmul.f32 %v981, 0.2
      %v1076 = vmul.f32 %v983, 0.2
      %v1077 = vmul.f32 %v987, 0.2
      %v1078 = vmul.f32 %v989, 0.2
      %v1079 = vmul.f32 %v993, 0.2
      %v1080 = vmul.f32 %v995, 0.2
      %v1081 = vmul.f32 %v999, 0.2
      %v1082 = vmul.f32 %v1001, 0.2
      %v1083 = vmul.f32 %v1005, 0.2
      %v1084 = vmul.f32 %v1007, 0.2
      %v1085 = vmul.f32 %v1011, 0.2
      %v1086 = vmul.f32 %v1013, 0.2
      %v1087 = vmul.f32 %v1017, 0.2
      %v1088 = vmul.f32 %v1019, 0.2
      %v1089 = vmul.f32 %v1023, 0.2
      %v1090 = vmul.f32 %v1025, 0.2
      %v1091 = vmax.f32 %v837, %v1027
      %v1092 = vmax.f32 %v839, %v1028
      %v1093 = vmax.f32 %v843, %v1029
      %v1094 = vmax.f32 %v845, %v1030
      %v1095 = vmax.f32 %v849, %v1031
      %v1096 = vmax.f32 %v851, %v1032
      %v1097 = vmax.f32 %v855, %v1033
      %v1098 = vmax.f32 %v857, %v1034
      %v1099 = vmax.f32 %v861, %v1035
      %v1100 = vmax.f32 %v863, %v1036
      %v1101 = vmax.f32 %v867, %v1037
      %v1102 = vmax.f32 %v869, %v1038
      %v1103 = vmax.f32 %v873, %v1039
      %v1104 = vmax.f32 %v875, %v1040
      %v1105 = vmax.f32 %v879, %v1041
      %v1106 = vmax.f32 %v881, %v1042
      %v1107 = vmax.f32 %v885, %v1043
      %v1108 = vmax.f32 %v887, %v1044
      %v1109 = vmax.f32 %v891, %v1045
      %v1110 = vmax.f32 %v893, %v1046
      %v1111 = vmax.f32 %v897, %v1047
      %v1112 = vmax.f32 %v899, %v1048
      %v1113 = vmax.f32 %v903, %v1049
      %v1114 = vmax.f32 %v905, %v1050
      %v1115 = vmax.f32 %v909, %v1051
      %v1116 = vmax.f32 %v911, %v1052
      %v1117 = vmax.f32 %v915, %v1053
      %v1118 = vmax.f32 %v917, %v1054
      %v1119 = vmax.f32 %v921, %v1055
      %v1120 = vmax.f32 %v923, %v1056
      %v1121 = vmax.f32 %v927, %v1057
      %v1122 = vmax.f32 %v929, %v1058
      %v1123 = vmax.f32 %v933, %v1059
      %v1124 = vmax.f32 %v935, %v1060
      %v1125 = vmax.f32 %v939, %v1061
      %v1126 = vmax.f32 %v941, %v1062
      %v1127 = vmax.f32 %v945, %v1063
      %v1128 = vmax.f32 %v947, %v1064
      %v1129 = vmax.f32 %v951, %v1065
      %v1130 = vmax.f32 %v953, %v1066
      %v1131 = vmax.f32 %v957, %v1067
      %v1132 = vmax.f32 %v959, %v1068
      %v1133 = vmax.f32 %v963, %v1069
      %v1134 = vmax.f32 %v965, %v1070
      %v1135 = vmax.f32 %v969, %v1071
      %v1136 = vmax.f32 %v971, %v1072
      %v1137 = vmax.f32 %v975, %v1073
      %v1138 = vmax.f32 %v977, %v1074
      %v1139 = vmax.f32 %v981, %v1075
      %v1140 = vmax.f32 %v983, %v1076
      %v1141 = vmax.f32 %v987, %v1077
      %v1142 = vmax.f32 %v989, %v1078
      %v1143 = vmax.f32 %v993, %v1079
      %v1144 = vmax.f32 %v995, %v1080
      %v1145 = vmax.f32 %v999, %v1081
      %v1146 = vmax.f32 %v1001, %v1082
      %v1147 = vmax.f32 %v1005, %v1083
      %v1148 = vmax.f32 %v1007, %v1084
      %v1149 = vmax.f32 %v1011, %v1085
      %v1150 = vmax.f32 %v1013, %v1086
      %v1151 = vmax.f32 %v1017, %v1087
      %v1152 = vmax.f32 %v1019, %v1088
      %v1153 = vmax.f32 %v1023, %v1089
      %v1154 = vmax.f32 %v1025, %v1090
      %v1155 = vld [vmem:[%s5] sm:$0xff]
      %v1156 = vld [vmem:[%s5 + $0x8] sm:$0xff]
      %v1157 = vld [vmem:[%s5 + $0x10] sm:$0xff]
      %v1158 = vld [vmem:[%s5 + $0x18] sm:$0xff]
      %v1159 = vld [vmem:[%s5 + $0x20] sm:$0xff]
      %v1160 = vld [vmem:[%s5 + $0x28] sm:$0xff]
      %v1161 = vld [vmem:[%s5 + $0x30] sm:$0xff]
      %v1162 = vld [vmem:[%s5 + $0x38] sm:$0xff]
      %v1163 = vld [vmem:[%s5 + $0x40] sm:$0xff]
      %v1164 = vld [vmem:[%s5 + $0x48] sm:$0xff]
      %v1165 = vld [vmem:[%s5 + $0x50] sm:$0xff]
      %v1166 = vld [vmem:[%s5 + $0x58] sm:$0xff]
      %v1167 = vld [vmem:[%s5 + $0x60] sm:$0xff]
      %v1168 = vld [vmem:[%s5 + $0x68] sm:$0xff]
      %v1169 = vld [vmem:[%s5 + $0x70] sm:$0xff]
      %v1170 = vld [vmem:[%s5 + $0x78] sm:$0xff]
      %v1171 = vld [vmem:[%s5 + $0x80] sm:$0xff]
      %v1172 = vld [vmem:[%s5 + $0x88] sm:$0xff]
      %v1173 = vld [vmem:[%s5 + $0x90] sm:$0xff]
      %v1174 = vld [vmem:[%s5 + $0x98] sm:$0xff]
      %v1175 = vld [vmem:[%s5 + $0xa0] sm:$0xff]
      %v1176 = vld [vmem:[%s5 + $0xa8] sm:$0xff]
      %v1177 = vld [vmem:[%s5 + $0xb0] sm:$0xff]
      %v1178 = vld [vmem:[%s5 + $0xb8] sm:$0xff]
      %v1179 = vld [vmem:[%s5 + $0xc0] sm:$0xff]
      %v1180 = vld [vmem:[%s5 + $0xc8] sm:$0xff]
      %v1181 = vld [vmem:[%s5 + $0xd0] sm:$0xff]
      %v1182 = vld [vmem:[%s5 + $0xd8] sm:$0xff]
      %v1183 = vld [vmem:[%s5 + $0xe0] sm:$0xff]
      %v1184 = vld [vmem:[%s5 + $0xe8] sm:$0xff]
      %v1185 = vld [vmem:[%s5 + $0xf0] sm:$0xff]
      %v1186 = vld [vmem:[%s5 + $0xf8] sm:$0xff]
      %v1187 = vld [vmem:[%s5 + $0x100] sm:$0xff]
      %v1188 = vld [vmem:[%s5 + $0x108] sm:$0xff]
      %v1189 = vld [vmem:[%s5 + $0x110] sm:$0xff]
      %v1190 = vld [vmem:[%s5 + $0x118] sm:$0xff]
      %v1191 = vld [vmem:[%s5 + $0x120] sm:$0xff]
      %v1192 = vld [vmem:[%s5 + $0x128] sm:$0xff]
      %v1193 = vld [vmem:[%s5 + $0x130] sm:$0xff]
      %v1194 = vld [vmem:[%s5 + $0x138] sm:$0xff]
      %v1195 = vld [vmem:[%s5 + $0x140] sm:$0xff]
      %v1196 = vld [vmem:[%s5 + $0x148] sm:$0xff]
      %v1197 = vld [vmem:[%s5 + $0x150] sm:$0xff]
      %v1198 = vld [vmem:[%s5 + $0x158] sm:$0xff]
      %v1199 = vld [vmem:[%s5 + $0x160] sm:$0xff]
      %v1200 = vld [vmem:[%s5 + $0x168] sm:$0xff]
      %v1201 = vld [vmem:[%s5 + $0x170] sm:$0xff]
      %v1202 = vld [vmem:[%s5 + $0x178] sm:$0xff]
      %v1203 = vld [vmem:[%s5 + $0x180] sm:$0xff]
      %v1204 = vld [vmem:[%s5 + $0x188] sm:$0xff]
      %v1205 = vld [vmem:[%s5 + $0x190] sm:$0xff]
      %v1206 = vld [vmem:[%s5 + $0x198] sm:$0xff]
      %v1207 = vld [vmem:[%s5 + $0x1a0] sm:$0xff]
      %v1208 = vld [vmem:[%s5 + $0x1a8] sm:$0xff]
      %v1209 = vld [vmem:[%s5 + $0x1b0] sm:$0xff]
      %v1210 = vld [vmem:[%s5 + $0x1b8] sm:$0xff]
      %v1211 = vld [vmem:[%s5 + $0x1c0] sm:$0xff]
      %v1212 = vld [vmem:[%s5 + $0x1c8] sm:$0xff]
      %v1213 = vld [vmem:[%s5 + $0x1d0] sm:$0xff]
      %v1214 = vld [vmem:[%s5 + $0x1d8] sm:$0xff]
      %v1215 = vld [vmem:[%s5 + $0x1e0] sm:$0xff]
      %v1216 = vld [vmem:[%s5 + $0x1e8] sm:$0xff]
      %v1217 = vld [vmem:[%s5 + $0x1f0] sm:$0xff]
      %v1218 = vld [vmem:[%s5 + $0x1f8] sm:$0xff]
      %v1219 = vld [vmem:[%s5 + $0x200] sm:$0xff]
      %v1220 = vld [vmem:[%s5 + $0x208] sm:$0xff]
      %v1221 = vld [vmem:[%s5 + $0x210] sm:$0xff]
      %v1222 = vld [vmem:[%s5 + $0x218] sm:$0xff]
      %v1223 = vld [vmem:[%s5 + $0x220] sm:$0xff]
      %v1224 = vld [vmem:[%s5 + $0x228] sm:$0xff]
      %v1225 = vld [vmem:[%s5 + $0x230] sm:$0xff]
      %v1226 = vld [vmem:[%s5 + $0x238] sm:$0xff]
      %v1227 = vld [vmem:[%s5 + $0x240] sm:$0xff]
      %v1228 = vld [vmem:[%s5 + $0x248] sm:$0xff]
      %v1229 = vld [vmem:[%s5 + $0x250] sm:$0xff]
      %v1230 = vld [vmem:[%s5 + $0x258] sm:$0xff]
      %v1231 = vld [vmem:[%s5 + $0x260] sm:$0xff]
      %v1232 = vld [vmem:[%s5 + $0x268] sm:$0xff]
      %v1233 = vld [vmem:[%s5 + $0x270] sm:$0xff]
      %v1234 = vld [vmem:[%s5 + $0x278] sm:$0xff]
      %v1235 = vld [vmem:[%s5 + $0x280] sm:$0xff]
      %v1236 = vld [vmem:[%s5 + $0x288] sm:$0xff]
      %v1237 = vld [vmem:[%s5 + $0x290] sm:$0xff]
      %v1238 = vld [vmem:[%s5 + $0x298] sm:$0xff]
      %v1239 = vld [vmem:[%s5 + $0x2a0] sm:$0xff]
      %v1240 = vld [vmem:[%s5 + $0x2a8] sm:$0xff]
      %v1241 = vld [vmem:[%s5 + $0x2b0] sm:$0xff]
      %v1242 = vld [vmem:[%s5 + $0x2b8] sm:$0xff]
      %v1243 = vld [vmem:[%s5 + $0x2c0] sm:$0xff]
      %v1244 = vld [vmem:[%s5 + $0x2c8] sm:$0xff]
      %v1245 = vld [vmem:[%s5 + $0x2d0] sm:$0xff]
      %v1246 = vld [vmem:[%s5 + $0x2d8] sm:$0xff]
      %v1247 = vld [vmem:[%s5 + $0x2e0] sm:$0xff]
      %v1248 = vld [vmem:[%s5 + $0x2e8] sm:$0xff]
      %v1249 = vld [vmem:[%s5 + $0x2f0] sm:$0xff]
      %v1250 = vld [vmem:[%s5 + $0x2f8] sm:$0xff]
      %v1251 = vld [vmem:[%s5 + $0x300] sm:$0xff]
      %v1252 = vld [vmem:[%s5 + $0x308] sm:$0xff]
      %v1253 = vld [vmem:[%s5 + $0x310] sm:$0xff]
      %v1254 = vld [vmem:[%s5 + $0x318] sm:$0xff]
      %v1255 = vld [vmem:[%s5 + $0x320] sm:$0xff]
      %v1256 = vld [vmem:[%s5 + $0x328] sm:$0xff]
      %v1257 = vld [vmem:[%s5 + $0x330] sm:$0xff]
      %v1258 = vld [vmem:[%s5 + $0x338] sm:$0xff]
      %v1259 = vld [vmem:[%s5 + $0x340] sm:$0xff]
      %v1260 = vld [vmem:[%s5 + $0x348] sm:$0xff]
      %v1261 = vld [vmem:[%s5 + $0x350] sm:$0xff]
      %v1262 = vld [vmem:[%s5 + $0x358] sm:$0xff]
      %v1263 = vld [vmem:[%s5 + $0x360] sm:$0xff]
      %v1264 = vld [vmem:[%s5 + $0x368] sm:$0xff]
      %v1265 = vld [vmem:[%s5 + $0x370] sm:$0xff]
      %v1266 = vld [vmem:[%s5 + $0x378] sm:$0xff]
      %v1267 = vld [vmem:[%s5 + $0x380] sm:$0xff]
      %v1268 = vld [vmem:[%s5 + $0x388] sm:$0xff]
      %v1269 = vld [vmem:[%s5 + $0x390] sm:$0xff]
      %v1270 = vld [vmem:[%s5 + $0x398] sm:$0xff]
      %v1271 = vld [vmem:[%s5 + $0x3a0] sm:$0xff]
      %v1272 = vld [vmem:[%s5 + $0x3a8] sm:$0xff]
      %v1273 = vld [vmem:[%s5 + $0x3b0] sm:$0xff]
      %v1274 = vld [vmem:[%s5 + $0x3b8] sm:$0xff]
      %v1275 = vld [vmem:[%s5 + $0x3c0] sm:$0xff]
      %v1276 = vld [vmem:[%s5 + $0x3c8] sm:$0xff]
      %v1277 = vld [vmem:[%s5 + $0x3d0] sm:$0xff]
      %v1278 = vld [vmem:[%s5 + $0x3d8] sm:$0xff]
      %v1279 = vld [vmem:[%s5 + $0x3e0] sm:$0xff]
      %v1280 = vld [vmem:[%s5 + $0x3e8] sm:$0xff]
      %v1281 = vld [vmem:[%s5 + $0x3f0] sm:$0xff]
      %v1282 = vld [vmem:[%s5 + $0x3f8] sm:$0xff]
      %v1283 = vld [vmem:[%s5 + $0x400] sm:$0xff]
      %v1284 = vld [vmem:[%s5 + $0x408] sm:$0xff]
      %v1285 = vld [vmem:[%s5 + $0x410] sm:$0xff]
      %v1286 = vld [vmem:[%s5 + $0x418] sm:$0xff]
      %v1287 = vld [vmem:[%s5 + $0x420] sm:$0xff]
      %v1288 = vld [vmem:[%s5 + $0x428] sm:$0xff]
      %v1289 = vld [vmem:[%s5 + $0x430] sm:$0xff]
      %v1290 = vld [vmem:[%s5 + $0x438] sm:$0xff]
      %v1291 = vld [vmem:[%s5 + $0x440] sm:$0xff]
      %v1292 = vld [vmem:[%s5 + $0x448] sm:$0xff]
      %v1293 = vld [vmem:[%s5 + $0x450] sm:$0xff]
      %v1294 = vld [vmem:[%s5 + $0x458] sm:$0xff]
      %v1295 = vld [vmem:[%s5 + $0x460] sm:$0xff]
      %v1296 = vld [vmem:[%s5 + $0x468] sm:$0xff]
      %v1297 = vld [vmem:[%s5 + $0x470] sm:$0xff]
      %v1298 = vld [vmem:[%s5 + $0x478] sm:$0xff]
      %v1299 = vld [vmem:[%s5 + $0x480] sm:$0xff]
      %v1300 = vld [vmem:[%s5 + $0x488] sm:$0xff]
      %v1301 = vld [vmem:[%s5 + $0x490] sm:$0xff]
      %v1302 = vld [vmem:[%s5 + $0x498] sm:$0xff]
      %v1303 = vld [vmem:[%s5 + $0x4a0] sm:$0xff]
      %v1304 = vld [vmem:[%s5 + $0x4a8] sm:$0xff]
      %v1305 = vld [vmem:[%s5 + $0x4b0] sm:$0xff]
      %v1306 = vld [vmem:[%s5 + $0x4b8] sm:$0xff]
      %v1307 = vld [vmem:[%s5 + $0x4c0] sm:$0xff]
      %v1308 = vld [vmem:[%s5 + $0x4c8] sm:$0xff]
      %v1309 = vld [vmem:[%s5 + $0x4d0] sm:$0xff]
      %v1310 = vld [vmem:[%s5 + $0x4d8] sm:$0xff]
      %v1311 = vld [vmem:[%s5 + $0x4e0] sm:$0xff]
      %v1312 = vld [vmem:[%s5 + $0x4e8] sm:$0xff]
      %v1313 = vld [vmem:[%s5 + $0x4f0] sm:$0xff]
      %v1314 = vld [vmem:[%s5 + $0x4f8] sm:$0xff]
      %v1315 = vld [vmem:[%s5 + $0x500] sm:$0xff]
      %v1316 = vld [vmem:[%s5 + $0x508] sm:$0xff]
      %v1317 = vld [vmem:[%s5 + $0x510] sm:$0xff]
      %v1318 = vld [vmem:[%s5 + $0x518] sm:$0xff]
      %v1319 = vld [vmem:[%s5 + $0x520] sm:$0xff]
      %v1320 = vld [vmem:[%s5 + $0x528] sm:$0xff]
      %v1321 = vld [vmem:[%s5 + $0x530] sm:$0xff]
      %v1322 = vld [vmem:[%s5 + $0x538] sm:$0xff]
      %v1323 = vld [vmem:[%s5 + $0x540] sm:$0xff]
      %v1324 = vld [vmem:[%s5 + $0x548] sm:$0xff]
      %v1325 = vld [vmem:[%s5 + $0x550] sm:$0xff]
      %v1326 = vld [vmem:[%s5 + $0x558] sm:$0xff]
      %v1327 = vld [vmem:[%s5 + $0x560] sm:$0xff]
      %v1328 = vld [vmem:[%s5 + $0x568] sm:$0xff]
      %v1329 = vld [vmem:[%s5 + $0x570] sm:$0xff]
      %v1330 = vld [vmem:[%s5 + $0x578] sm:$0xff]
      %v1331 = vld [vmem:[%s5 + $0x580] sm:$0xff]
      %v1332 = vld [vmem:[%s5 + $0x588] sm:$0xff]
      %v1333 = vld [vmem:[%s5 + $0x590] sm:$0xff]
      %v1334 = vld [vmem:[%s5 + $0x598] sm:$0xff]
      %v1335 = vld [vmem:[%s5 + $0x5a0] sm:$0xff]
      %v1336 = vld [vmem:[%s5 + $0x5a8] sm:$0xff]
      %v1337 = vld [vmem:[%s5 + $0x5b0] sm:$0xff]
      %v1338 = vld [vmem:[%s5 + $0x5b8] sm:$0xff]
      %v1339 = vld [vmem:[%s5 + $0x5c0] sm:$0xff]
      %v1340 = vld [vmem:[%s5 + $0x5c8] sm:$0xff]
      %v1341 = vld [vmem:[%s5 + $0x5d0] sm:$0xff]
      %v1342 = vld [vmem:[%s5 + $0x5d8] sm:$0xff]
      %v1343 = vld [vmem:[%s5 + $0x5e0] sm:$0xff]
      %v1344 = vld [vmem:[%s5 + $0x5e8] sm:$0xff]
      %v1345 = vld [vmem:[%s5 + $0x5f0] sm:$0xff]
      %v1346 = vld [vmem:[%s5 + $0x5f8] sm:$0xff]
      %v1347 = vld [vmem:[%s5 + $0x600] sm:$0xff]
      %v1348 = vld [vmem:[%s5 + $0x608] sm:$0xff]
      %v1349 = vld [vmem:[%s5 + $0x610] sm:$0xff]
      %v1350 = vld [vmem:[%s5 + $0x618] sm:$0xff]
      %v1351 = vld [vmem:[%s5 + $0x620] sm:$0xff]
      %v1352 = vld [vmem:[%s5 + $0x628] sm:$0xff]
      %v1353 = vld [vmem:[%s5 + $0x630] sm:$0xff]
      %v1354 = vld [vmem:[%s5 + $0x638] sm:$0xff]
      %v1355 = vld [vmem:[%s5 + $0x640] sm:$0xff]
      %v1356 = vld [vmem:[%s5 + $0x648] sm:$0xff]
      %v1357 = vld [vmem:[%s5 + $0x650] sm:$0xff]
      %v1358 = vld [vmem:[%s5 + $0x658] sm:$0xff]
      %v1359 = vld [vmem:[%s5 + $0x660] sm:$0xff]
      %v1360 = vld [vmem:[%s5 + $0x668] sm:$0xff]
      %v1361 = vld [vmem:[%s5 + $0x670] sm:$0xff]
      %v1362 = vld [vmem:[%s5 + $0x678] sm:$0xff]
      %v1363 = vld [vmem:[%s5 + $0x680] sm:$0xff]
      %v1364 = vld [vmem:[%s5 + $0x688] sm:$0xff]
      %v1365 = vld [vmem:[%s5 + $0x690] sm:$0xff]
      %v1366 = vld [vmem:[%s5 + $0x698] sm:$0xff]
      %v1367 = vld [vmem:[%s5 + $0x6a0] sm:$0xff]
      %v1368 = vld [vmem:[%s5 + $0x6a8] sm:$0xff]
      %v1369 = vld [vmem:[%s5 + $0x6b0] sm:$0xff]
      %v1370 = vld [vmem:[%s5 + $0x6b8] sm:$0xff]
      %v1371 = vld [vmem:[%s5 + $0x6c0] sm:$0xff]
      %v1372 = vld [vmem:[%s5 + $0x6c8] sm:$0xff]
      %v1373 = vld [vmem:[%s5 + $0x6d0] sm:$0xff]
      %v1374 = vld [vmem:[%s5 + $0x6d8] sm:$0xff]
      %v1375 = vld [vmem:[%s5 + $0x6e0] sm:$0xff]
      %v1376 = vld [vmem:[%s5 + $0x6e8] sm:$0xff]
      %v1377 = vld [vmem:[%s5 + $0x6f0] sm:$0xff]
      %v1378 = vld [vmem:[%s5 + $0x6f8] sm:$0xff]
      %v1379 = vld [vmem:[%s6] sm:$0x7f]
      %v1381 = vlaneseq
      %v1382 = vshrl.u32 %v1381, 7
      %v1383 = vsub.s32 0, %v1382
      %v1384 = vrot.slane %v1379, %v1383
      %v1385 = vlaneseq
      %v1386 = vshrl.u32 %v1385, 7
      %v1387 = vsub.s32 1, %v1386
      %v1388 = vrot.slane %v1379, %v1387
      %v1389 = vlaneseq
      %v1390 = vshrl.u32 %v1389, 7
      %v1391 = vsub.s32 2, %v1390
      %v1392 = vrot.slane %v1379, %v1391
      %v1393 = vlaneseq
      %v1394 = vshrl.u32 %v1393, 7
      %v1395 = vsub.s32 3, %v1394
      %v1396 = vrot.slane %v1379, %v1395
      %v1397 = vlaneseq
      %v1398 = vshrl.u32 %v1397, 7
      %v1399 = vsub.s32 4, %v1398
      %v1400 = vrot.slane %v1379, %v1399
      %v1401 = vlaneseq
      %v1402 = vshrl.u32 %v1401, 7
      %v1403 = vsub.s32 5, %v1402
      %v1404 = vrot.slane %v1379, %v1403
      %v1405 = vlaneseq
      %v1406 = vshrl.u32 %v1405, 7
      %v1407 = vsub.s32 6, %v1406
      %v1408 = vrot.slane %v1379, %v1407
      %1416 = vmatprep.subr.mxu0 %v1156
      %1417 = vmatpush1.msra.mxu0 %v1155
      %1418 = vmatprep.subr.mxu0 %v1163
      %1419 = vmatpush1.msra.mxu0 %v1162
      %1420 = vmatprep.subr.mxu0 %v1170
      %1421 = vmatpush1.msra.mxu0 %v1169
      %1422 = vmatprep.subr.mxu0 %v1177
      %1423 = vmatpush1.msra.mxu0 %v1176
      %1424 = vmatprep.subr.mxu0 %v1184
      %1425 = vmatpush1.msra.mxu0 %v1183
      %1426 = vmatprep.subr.mxu0 %v1191
      %1427 = vmatpush1.msra.mxu0 %v1190
      %1428 = vmatprep.subr.mxu0 %v1198
      %1429 = vmatpush1.msra.mxu0 %v1197
      %1430 = vmatprep.subr.mxu0 %v1205
      %1431 = vmatpush1.msra.mxu0 %v1204
      %1432 = vmatprep.subr.mxu0 %v1212
      %1433 = vmatpush1.msra.mxu0 %v1211
      %1434 = vmatprep.subr.mxu0 %v1219
      %1435 = vmatpush1.msra.mxu0 %v1218
      %1436 = vmatprep.subr.mxu0 %v1226
      %1437 = vmatpush1.msra.mxu0 %v1225
      %1438 = vmatprep.subr.mxu0 %v1233
      %1439 = vmatpush1.msra.mxu0 %v1232
      %1440 = vmatprep.subr.mxu0 %v1240
      %1441 = vmatpush1.msra.mxu0 %v1239
      %1442 = vmatprep.subr.mxu0 %v1247
      %1443 = vmatpush1.msra.mxu0 %v1246
      %1444 = vmatprep.subr.mxu0 %v1254
      %1445 = vmatpush1.msra.mxu0 %v1253
      %1446 = vmatprep.subr.mxu0 %v1261
      %1447 = vmatpush1.msra.mxu0 %v1260
      %1448 = vmatprep.subr.mxu0 %v1268
      %1449 = vmatpush1.msra.mxu0 %v1267
      %1450 = vmatprep.subr.mxu0 %v1275
      %1451 = vmatpush1.msra.mxu0 %v1274
      %1452 = vmatprep.subr.mxu0 %v1282
      %1453 = vmatpush1.msra.mxu0 %v1281
      %1454 = vmatprep.subr.mxu0 %v1289
      %1455 = vmatpush1.msra.mxu0 %v1288
      %1456 = vmatprep.subr.mxu0 %v1296
      %1457 = vmatpush1.msra.mxu0 %v1295
      %1458 = vmatprep.subr.mxu0 %v1303
      %1459 = vmatpush1.msra.mxu0 %v1302
      %1460 = vmatprep.subr.mxu0 %v1310
      %1461 = vmatpush1.msra.mxu0 %v1309
      %1462 = vmatprep.subr.mxu0 %v1317
      %1463 = vmatpush1.msra.mxu0 %v1316
      %1464 = vmatprep.subr.mxu0 %v1324
      %1465 = vmatpush1.msra.mxu0 %v1323
      %1466 = vmatprep.subr.mxu0 %v1331
      %1467 = vmatpush1.msra.mxu0 %v1330
      %1468 = vmatprep.subr.mxu0 %v1338
      %1469 = vmatpush1.msra.mxu0 %v1337
      %1470 = vmatprep.subr.mxu0 %v1345
      %1471 = vmatpush1.msra.mxu0 %v1344
      %1472 = vmatprep.subr.mxu0 %v1352
      %1473 = vmatpush1.msra.mxu0 %v1351
      %1474 = vmatprep.subr.mxu0 %v1359
      %1475 = vmatpush1.msra.mxu0 %v1358
      %1476 = vmatprep.subr.mxu0 %v1366
      %1477 = vmatpush1.msra.mxu0 %v1365
      %1478 = vmatprep.subr.mxu0 %v1373
      %1479 = vmatpush1.msra.mxu0 %v1372
      %1480 = vmatprep.mubr.f32.mxu0 %v1092
      %1481 = vmatmul.mubr.f32.gmra.mrb[0].mxu0 %v1091
      %v1482 = vpop.f32.mrb[0].mxu0
      %v1483 = vadd.f32 %v1384, %v1482
      %v1484 = vpop.f32.mrb[0].mxu0
      %v1485 = vadd.f32 %v1388, %v1484
      %1486 = vmatprep.mubr.f32.mxu0 %v1094
      %1487 = vmatmul.mubr.f32.gmra.mrb[0].mxu0 %v1093
      %v1488 = vpop.f32.mrb[0].mxu0
      %v1489 = vadd.f32 %v1384, %v1488
      %v1490 = vpop.f32.mrb[0].mxu0
      %v1491 = vadd.f32 %v1388, %v1490
      %1492 = vmatprep.mubr.f32.mxu0 %v1096
      %1493 = vmatmul.mubr.f32.gmra.mrb[0].mxu0 %v1095
      %v1494 = vpop.f32.mrb[0].mxu0
      %v1495 = vadd.f32 %v1384, %v1494
      %v1496 = vpop.f32.mrb[0].mxu0
      %v1497 = vadd.f32 %v1388, %v1496
      %1498 = vmatprep.mubr.f32.mxu0 %v1098
      %1499 = vmatmul.mubr.f32.gmra.mrb[0].mxu0 %v1097
      %v1500 = vpop.f32.mrb[0].mxu0
      %v1501 = vadd.f32 %v1384, %v1500
      %v1502 = vpop.f32.mrb[0].mxu0
      %v1503 = vadd.f32 %v1388, %v1502
      %1504 = vmatprep.mubr.f32.mxu0 %v1100
      %1505 = vmatmul.mubr.f32.gmra.mrb[0].mxu0 %v1099
      %v1506 = vpop.f32.mrb[0].mxu0
      %v1507 = vadd.f32 %v1384, %v1506
      %v1508 = vpop.f32.mrb[0].mxu0
      %v1509 = vadd.f32 %v1388, %v1508
      %1510 = vmatprep.mubr.f32.mxu0 %v1102
      %1511 = vmatmul.mubr.f32.gmra.mrb[0].mxu0 %v1101
      %v1512 = vpop.f32.mrb[0].mxu0
      %v1513 = vadd.f32 %v1384, %v1512
      %v1514 = vpop.f32.mrb[0].mxu0
      %v1515 = vadd.f32 %v1388, %v1514
      %1516 = vmatprep.mubr.f32.mxu0 %v1104
      %1517 = vmatmul.mubr.f32.gmra.mrb[0].mxu0 %v1103
      %v1518 = vpop.f32.mrb[0].mxu0
      %v1519 = vadd.f32 %v1384, %v1518
      %v1520 = vpop.f32.mrb[0].mxu0
      %v1521 = vadd.f32 %v1388, %v1520
      %1522 = vmatprep.mubr.f32.mxu0 %v1106
      %1523 = vmatmul.mubr.f32.gmra.mrb[0].mxu0 %v1105
      %v1524 = vpop.f32.mrb[0].mxu0
      %v1525 = vadd.f32 %v1384, %v1524
      %v1526 = vpop.f32.mrb[0].mxu0
      %v1527 = vadd.f32 %v1388, %v1526
      %1528 = vmatprep.mubr.f32.mxu0 %v1108
      %1529 = vmatmul.mubr.f32.gmra.mrb[0].mxu0 %v1107
      %v1530 = vpop.f32.mrb[0].mxu0
      %v1531 = vadd.f32 %v1384, %v1530
      %v1532 = vpop.f32.mrb[0].mxu0
      %v1533 = vadd.f32 %v1388, %v1532
      %1534 = vmatprep.mubr.f32.mxu0 %v1110
      %1535 = vmatmul.mubr.f32.gmra.mrb[0].mxu0 %v1109
      %v1536 = vpop.f32.mrb[0].mxu0
      %v1537 = vadd.f32 %v1384, %v1536
      %v1538 = vpop.f32.mrb[0].mxu0
      %v1539 = vadd.f32 %v1388, %v1538
      %1540 = vmatprep.mubr.f32.mxu0 %v1112
      %1541 = vmatmul.mubr.f32.gmra.mrb[0].mxu0 %v1111
      %v1542 = vpop.f32.mrb[0].mxu0
      %v1543 = vadd.f32 %v1384, %v1542
      %v1544 = vpop.f32.mrb[0].mxu0
      %v1545 = vadd.f32 %v1388, %v1544
      %1546 = vmatprep.mubr.f32.mxu0 %v1114
      %1547 = vmatmul.mubr.f32.gmra.mrb[0].mxu0 %v1113
      %v1548 = vpop.f32.mrb[0].mxu0
      %v1549 = vadd.f32 %v1384, %v1548
      %v1550 = vpop.f32.mrb[0].mxu0
      %v1551 = vadd.f32 %v1388, %v1550
      %1552 = vmatprep.mubr.f32.mxu0 %v1116
      %1553 = vmatmul.mubr.f32.gmra.mrb[0].mxu0 %v1115
      %v1554 = vpop.f32.mrb[0].mxu0
      %v1555 = vadd.f32 %v1384, %v1554
      %v1556 = vpop.f32.mrb[0].mxu0
      %v1557 = vadd.f32 %v1388, %v1556
      %1558 = vmatprep.mubr.f32.mxu0 %v1118
      %1559 = vmatmul.mubr.f32.gmra.mrb[0].mxu0 %v1117
      %v1560 = vpop.f32.mrb[0].mxu0
      %v1561 = vadd.f32 %v1384, %v1560
      %v1562 = vpop.f32.mrb[0].mxu0
      %v1563 = vadd.f32 %v1388, %v1562
      %1564 = vmatprep.mubr.f32.mxu0 %v1120
      %1565 = vmatmul.mubr.f32.gmra.mrb[0].mxu0 %v1119
      %v1566 = vpop.f32.mrb[0].mxu0
      %v1567 = vadd.f32 %v1384, %v1566
      %v1568 = vpop.f32.mrb[0].mxu0
      %v1569 = vadd.f32 %v1388, %v1568
      %1570 = vmatprep.mubr.f32.mxu0 %v1122
      %1571 = vmatmul.mubr.f32.gmra.mrb[0].mxu0 %v1121
      %v1572 = vpop.f32.mrb[0].mxu0
      %v1573 = vadd.f32 %v1384, %v1572
      %v1574 = vpop.f32.mrb[0].mxu0
      %v1575 = vadd.f32 %v1388, %v1574
      %1576 = vmatprep.mubr.f32.mxu0 %v1124
      %1577 = vmatmul.mubr.f32.gmra.mrb[0].mxu0 %v1123
      %v1578 = vpop.f32.mrb[0].mxu0
      %v1579 = vadd.f32 %v1384, %v1578
      %v1580 = vpop.f32.mrb[0].mxu0
      %v1581 = vadd.f32 %v1388, %v1580
      %1582 = vmatprep.mubr.f32.mxu0 %v1126
      %1583 = vmatmul.mubr.f32.gmra.mrb[0].mxu0 %v1125
      %v1584 = vpop.f32.mrb[0].mxu0
      %v1585 = vadd.f32 %v1384, %v1584
      %v1586 = vpop.f32.mrb[0].mxu0
      %v1587 = vadd.f32 %v1388, %v1586
      %1588 = vmatprep.mubr.f32.mxu0 %v1128
      %1589 = vmatmul.mubr.f32.gmra.mrb[0].mxu0 %v1127
      %v1590 = vpop.f32.mrb[0].mxu0
      %v1591 = vadd.f32 %v1384, %v1590
      %v1592 = vpop.f32.mrb[0].mxu0
      %v1593 = vadd.f32 %v1388, %v1592
      %1594 = vmatprep.mubr.f32.mxu0 %v1130
      %1595 = vmatmul.mubr.f32.gmra.mrb[0].mxu0 %v1129
      %v1596 = vpop.f32.mrb[0].mxu0
      %v1597 = vadd.f32 %v1384, %v1596
      %v1598 = vpop.f32.mrb[0].mxu0
      %v1599 = vadd.f32 %v1388, %v1598
      %1600 = vmatprep.mubr.f32.mxu0 %v1132
      %1601 = vmatmul.mubr.f32.gmra.mrb[0].mxu0 %v1131
      %v1602 = vpop.f32.mrb[0].mxu0
      %v1603 = vadd.f32 %v1384, %v1602
      %v1604 = vpop.f32.mrb[0].mxu0
      %v1605 = vadd.f32 %v1388, %v1604
      %1606 = vmatprep.mubr.f32.mxu0 %v1134
      %1607 = vmatmul.mubr.f32.gmra.mrb[0].mxu0 %v1133
      %v1608 = vpop.f32.mrb[0].mxu0
      %v1609 = vadd.f32 %v1384, %v1608
      %v1610 = vpop.f32.mrb[0].mxu0
      %v1611 = vadd.f32 %v1388, %v1610
      %1612 = vmatprep.mubr.f32.mxu0 %v1136
      %1613 = vmatmul.mubr.f32.gmra.mrb[0].mxu0 %v1135
      %v1614 = vpop.f32.mrb[0].mxu0
      %v1615 = vadd.f32 %v1384, %v1614
      %v1616 = vpop.f32.mrb[0].mxu0
      %v1617 = vadd.f32 %v1388, %v1616
      %1618 = vmatprep.mubr.f32.mxu0 %v1138
      %1619 = vmatmul.mubr.f32.gmra.mrb[0].mxu0 %v1137
      %v1620 = vpop.f32.mrb[0].mxu0
      %v1621 = vadd.f32 %v1384, %v1620
      %v1622 = vpop.f32.mrb[0].mxu0
      %v1623 = vadd.f32 %v1388, %v1622
      %1624 = vmatprep.mubr.f32.mxu0 %v1140
      %1625 = vmatmul.mubr.f32.gmra.mrb[0].mxu0 %v1139
      %v1626 = vpop.f32.mrb[0].mxu0
      %v1627 = vadd.f32 %v1384, %v1626
      %v1628 = vpop.f32.mrb[0].mxu0
      %v1629 = vadd.f32 %v1388, %v1628
      %1630 = vmatprep.mubr.f32.mxu0 %v1142
      %1631 = vmatmul.mubr.f32.gmra.mrb[0].mxu0 %v1141
      %v1632 = vpop.f32.mrb[0].mxu0
      %v1633 = vadd.f32 %v1384, %v1632
      %v1634 = vpop.f32.mrb[0].mxu0
      %v1635 = vadd.f32 %v1388, %v1634
      %1636 = vmatprep.mubr.f32.mxu0 %v1144
      %1637 = vmatmul.mubr.f32.gmra.mrb[0].mxu0 %v1143
      %v1638 = vpop.f32.mrb[0].mxu0
      %v1639 = vadd.f32 %v1384, %v1638
      %v1640 = vpop.f32.mrb[0].mxu0
      %v1641 = vadd.f32 %v1388, %v1640
      %1642 = vmatprep.mubr.f32.mxu0 %v1146
      %1643 = vmatmul.mubr.f32.gmra.mrb[0].mxu0 %v1145
      %v1644 = vpop.f32.mrb[0].mxu0
      %v1645 = vadd.f32 %v1384, %v1644
      %v1646 = vpop.f32.mrb[0].mxu0
      %v1647 = vadd.f32 %v1388, %v1646
      %1648 = vmatprep.mubr.f32.mxu0 %v1148
      %1649 = vmatmul.mubr.f32.gmra.mrb[0].mxu0 %v1147
      %v1650 = vpop.f32.mrb[0].mxu0
      %v1651 = vadd.f32 %v1384, %v1650
      %v1652 = vpop.f32.mrb[0].mxu0
      %v1653 = vadd.f32 %v1388, %v1652
      %1654 = vmatprep.mubr.f32.mxu0 %v1150
      %1655 = vmatmul.mubr.f32.gmra.mrb[0].mxu0 %v1149
      %v1656 = vpop.f32.mrb[0].mxu0
      %v1657 = vadd.f32 %v1384, %v1656
      %v1658 = vpop.f32.mrb[0].mxu0
      %v1659 = vadd.f32 %v1388, %v1658
      %1660 = vmatprep.mubr.f32.mxu0 %v1152
      %1661 = vmatmul.mubr.f32.gmra.mrb[0].mxu0 %v1151
      %v1662 = vpop.f32.mrb[0].mxu0
      %v1663 = vadd.f32 %v1384, %v1662
      %v1664 = vpop.f32.mrb[0].mxu0
      %v1665 = vadd.f32 %v1388, %v1664
      %1666 = vmatprep.mubr.f32.mxu0 %v1154
      %1667 = vmatmul.mubr.f32.gmra.mrb[0].mxu0 %v1153
      %v1668 = vpop.f32.mrb[0].mxu0
      %v1669 = vadd.f32 %v1384, %v1668
      %v1670 = vpop.f32.mrb[0].mxu0
      %v1671 = vadd.f32 %v1388, %v1670
      %1672 = vdwg.mxu0
      %1673 = vmatprep.subr.mxu0 %v1158
      %1674 = vmatpush1.msra.mxu0 %v1157
      %1675 = vmatprep.subr.mxu0 %v1165
      %1676 = vmatpush1.msra.mxu0 %v1164
      %1677 = vmatprep.subr.mxu0 %v1172
      %1678 = vmatpush1.msra.mxu0 %v1171
      %1679 = vmatprep.subr.mxu0 %v1179
      %1680 = vmatpush1.msra.mxu0 %v1178
      %1681 = vmatprep.subr.mxu0 %v1186
      %1682 = vmatpush1.msra.mxu0 %v1185
      %1683 = vmatprep.subr.mxu0 %v1193
      %1684 = vmatpush1.msra.mxu0 %v1192
      %1685 = vmatprep.subr.mxu0 %v1200
      %1686 = vmatpush1.msra.mxu0 %v1199
      %1687 = vmatprep.subr.mxu0 %v1207
      %1688 = vmatpush1.msra.mxu0 %v1206
      %1689 = vmatprep.subr.mxu0 %v1214
      %1690 = vmatpush1.msra.mxu0 %v1213
      %1691 = vmatprep.subr.mxu0 %v1221
      %1692 = vmatpush1.msra.mxu0 %v1220
      %1693 = vmatprep.subr.mxu0 %v1228
      %1694 = vmatpush1.msra.mxu0 %v1227
      %1695 = vmatprep.subr.mxu0 %v1235
      %1696 = vmatpush1.msra.mxu0 %v1234
      %1697 = vmatprep.subr.mxu0 %v1242
      %1698 = vmatpush1.msra.mxu0 %v1241
      %1699 = vmatprep.subr.mxu0 %v1249
      %1700 = vmatpush1.msra.mxu0 %v1248
      %1701 = vmatprep.subr.mxu0 %v1256
      %1702 = vmatpush1.msra.mxu0 %v1255
      %1703 = vmatprep.subr.mxu0 %v1263
      %1704 = vmatpush1.msra.mxu0 %v1262
      %1705 = vmatprep.subr.mxu0 %v1270
      %1706 = vmatpush1.msra.mxu0 %v1269
      %1707 = vmatprep.subr.mxu0 %v1277
      %1708 = vmatpush1.msra.mxu0 %v1276
      %1709 = vmatprep.subr.mxu0 %v1284
      %1710 = vmatpush1.msra.mxu0 %v1283
      %1711 = vmatprep.subr.mxu0 %v1291
      %1712 = vmatpush1.msra.mxu0 %v1290
      %1713 = vmatprep.subr.mxu0 %v1298
      %1714 = vmatpush1.msra.mxu0 %v1297
      %1715 = vmatprep.subr.mxu0 %v1305
      %1716 = vmatpush1.msra.mxu0 %v1304
      %1717 = vmatprep.subr.mxu0 %v1312
      %1718 = vmatpush1.msra.mxu0 %v1311
      %1719 = vmatprep.subr.mxu0 %v1319
      %1720 = vmatpush1.msra.mxu0 %v1318
      %1721 = vmatprep.subr.mxu0 %v1326
      %1722 = vmatpush1.msra.mxu0 %v1325
      %1723 = vmatprep.subr.mxu0 %v1333
      %1724 = vmatpush1.msra.mxu0 %v1332
      %1725 = vmatprep.subr.mxu0 %v1340
      %1726 = vmatpush1.msra.mxu0 %v1339
      %1727 = vmatprep.subr.mxu0 %v1347
      %1728 = vmatpush1.msra.mxu0 %v1346
      %1729 = vmatprep.subr.mxu0 %v1354
      %1730 = vmatpush1.msra.mxu0 %v1353
      %1731 = vmatprep.subr.mxu0 %v1361
      %1732 = vmatpush1.msra.mxu0 %v1360
      %1733 = vmatprep.subr.mxu0 %v1368
      %1734 = vmatpush1.msra.mxu0 %v1367
      %1735 = vmatprep.subr.mxu0 %v1375
      %1736 = vmatpush1.msra.mxu0 %v1374
      %1737 = vmatprep.mubr.f32.mxu0 %v1092
      %1738 = vmatmul.mubr.f32.gmra.mrb[0].mxu0 %v1091
      %v1739 = vpop.f32.mrb[0].mxu0
      %v1740 = vadd.f32 %v1392, %v1739
      %v1741 = vpop.f32.mrb[0].mxu0
      %v1742 = vadd.f32 %v1396, %v1741
      %1743 = vmatprep.mubr.f32.mxu0 %v1094
      %1744 = vmatmul.mubr.f32.gmra.mrb[0].mxu0 %v1093
      %v1745 = vpop.f32.mrb[0].mxu0
      %v1746 = vadd.f32 %v1392, %v1745
      %v1747 = vpop.f32.mrb[0].mxu0
      %v1748 = vadd.f32 %v1396, %v1747
      %1749 = vmatprep.mubr.f32.mxu0 %v1096
      %1750 = vmatmul.mubr.f32.gmra.mrb[0].mxu0 %v1095
      %v1751 = vpop.f32.mrb[0].mxu0
      %v1752 = vadd.f32 %v1392, %v1751
      %v1753 = vpop.f32.mrb[0].mxu0
      %v1754 = vadd.f32 %v1396, %v1753
      %1755 = vmatprep.mubr.f32.mxu0 %v1098
      %1756 = vmatmul.mubr.f32.gmra.mrb[0].mxu0 %v1097
      %v1757 = vpop.f32.mrb[0].mxu0
      %v1758 = vadd.f32 %v1392, %v1757
      %v1759 = vpop.f32.mrb[0].mxu0
      %v1760 = vadd.f32 %v1396, %v1759
      %1761 = vmatprep.mubr.f32.mxu0 %v1100
      %1762 = vmatmul.mubr.f32.gmra.mrb[0].mxu0 %v1099
      %v1763 = vpop.f32.mrb[0].mxu0
      %v1764 = vadd.f32 %v1392, %v1763
      %v1765 = vpop.f32.mrb[0].mxu0
      %v1766 = vadd.f32 %v1396, %v1765
      %1767 = vmatprep.mubr.f32.mxu0 %v1102
      %1768 = vmatmul.mubr.f32.gmra.mrb[0].mxu0 %v1101
      %v1769 = vpop.f32.mrb[0].mxu0
      %v1770 = vadd.f32 %v1392, %v1769
      %v1771 = vpop.f32.mrb[0].mxu0
      %v1772 = vadd.f32 %v1396, %v1771
      %1773 = vmatprep.mubr.f32.mxu0 %v1104
      %1774 = vmatmul.mubr.f32.gmra.mrb[0].mxu0 %v1103
      %v1775 = vpop.f32.mrb[0].mxu0
      %v1776 = vadd.f32 %v1392, %v1775
      %v1777 = vpop.f32.mrb[0].mxu0
      %v1778 = vadd.f32 %v1396, %v1777
      %1779 = vmatprep.mubr.f32.mxu0 %v1106
      %1780 = vmatmul.mubr.f32.gmra.mrb[0].mxu0 %v1105
      %v1781 = vpop.f32.mrb[0].mxu0
      %v1782 = vadd.f32 %v1392, %v1781
      %v1783 = vpop.f32.mrb[0].mxu0
      %v1784 = vadd.f32 %v1396, %v1783
      %1785 = vmatprep.mubr.f32.mxu0 %v1108
      %1786 = vmatmul.mubr.f32.gmra.mrb[0].mxu0 %v1107
      %v1787 = vpop.f32.mrb[0].mxu0
      %v1788 = vadd.f32 %v1392, %v1787
      %v1789 = vpop.f32.mrb[0].mxu0
      %v1790 = vadd.f32 %v1396, %v1789
      %1791 = vmatprep.mubr.f32.mxu0 %v1110
      %1792 = vmatmul.mubr.f32.gmra.mrb[0].mxu0 %v1109
      %v1793 = vpop.f32.mrb[0].mxu0
      %v1794 = vadd.f32 %v1392, %v1793
      %v1795 = vpop.f32.mrb[0].mxu0
      %v1796 = vadd.f32 %v1396, %v1795
      %1797 = vmatprep.mubr.f32.mxu0 %v1112
      %1798 = vmatmul.mubr.f32.gmra.mrb[0].mxu0 %v1111
      %v1799 = vpop.f32.mrb[0].mxu0
      %v1800 = vadd.f32 %v1392, %v1799
      %v1801 = vpop.f32.mrb[0].mxu0
      %v1802 = vadd.f32 %v1396, %v1801
      %1803 = vmatprep.mubr.f32.mxu0 %v1114
      %1804 = vmatmul.mubr.f32.gmra.mrb[0].mxu0 %v1113
      %v1805 = vpop.f32.mrb[0].mxu0
      %v1806 = vadd.f32 %v1392, %v1805
      %v1807 = vpop.f32.mrb[0].mxu0
      %v1808 = vadd.f32 %v1396, %v1807
      %1809 = vmatprep.mubr.f32.mxu0 %v1116
      %1810 = vmatmul.mubr.f32.gmra.mrb[0].mxu0 %v1115
      %v1811 = vpop.f32.mrb[0].mxu0
      %v1812 = vadd.f32 %v1392, %v1811
      %v1813 = vpop.f32.mrb[0].mxu0
      %v1814 = vadd.f32 %v1396, %v1813
      %1815 = vmatprep.mubr.f32.mxu0 %v1118
      %1816 = vmatmul.mubr.f32.gmra.mrb[0].mxu0 %v1117
      %v1817 = vpop.f32.mrb[0].mxu0
      %v1818 = vadd.f32 %v1392, %v1817
      %v1819 = vpop.f32.mrb[0].mxu0
      %v1820 = vadd.f32 %v1396, %v1819
      %1821 = vmatprep.mubr.f32.mxu0 %v1120
      %1822 = vmatmul.mubr.f32.gmra.mrb[0].mxu0 %v1119
      %v1823 = vpop.f32.mrb[0].mxu0
      %v1824 = vadd.f32 %v1392, %v1823
      %v1825 = vpop.f32.mrb[0].mxu0
      %v1826 = vadd.f32 %v1396, %v1825
      %1827 = vmatprep.mubr.f32.mxu0 %v1122
      %1828 = vmatmul.mubr.f32.gmra.mrb[0].mxu0 %v1121
      %v1829 = vpop.f32.mrb[0].mxu0
      %v1830 = vadd.f32 %v1392, %v1829
      %v1831 = vpop.f32.mrb[0].mxu0
      %v1832 = vadd.f32 %v1396, %v1831
      %1833 = vmatprep.mubr.f32.mxu0 %v1124
      %1834 = vmatmul.mubr.f32.gmra.mrb[0].mxu0 %v1123
      %v1835 = vpop.f32.mrb[0].mxu0
      %v1836 = vadd.f32 %v1392, %v1835
      %v1837 = vpop.f32.mrb[0].mxu0
      %v1838 = vadd.f32 %v1396, %v1837
      %1839 = vmatprep.mubr.f32.mxu0 %v1126
      %1840 = vmatmul.mubr.f32.gmra.mrb[0].mxu0 %v1125
      %v1841 = vpop.f32.mrb[0].mxu0
      %v1842 = vadd.f32 %v1392, %v1841
      %v1843 = vpop.f32.mrb[0].mxu0
      %v1844 = vadd.f32 %v1396, %v1843
      %1845 = vmatprep.mubr.f32.mxu0 %v1128
      %1846 = vmatmul.mubr.f32.gmra.mrb[0].mxu0 %v1127
      %v1847 = vpop.f32.mrb[0].mxu0
      %v1848 = vadd.f32 %v1392, %v1847
      %v1849 = vpop.f32.mrb[0].mxu0
      %v1850 = vadd.f32 %v1396, %v1849
      %1851 = vmatprep.mubr.f32.mxu0 %v1130
      %1852 = vmatmul.mubr.f32.gmra.mrb[0].mxu0 %v1129
      %v1853 = vpop.f32.mrb[0].mxu0
      %v1854 = vadd.f32 %v1392, %v1853
      %v1855 = vpop.f32.mrb[0].mxu0
      %v1856 = vadd.f32 %v1396, %v1855
      %1857 = vmatprep.mubr.f32.mxu0 %v1132
      %1858 = vmatmul.mubr.f32.gmra.mrb[0].mxu0 %v1131
      %v1859 = vpop.f32.mrb[0].mxu0
      %v1860 = vadd.f32 %v1392, %v1859
      %v1861 = vpop.f32.mrb[0].mxu0
      %v1862 = vadd.f32 %v1396, %v1861
      %1863 = vmatprep.mubr.f32.mxu0 %v1134
      %1864 = vmatmul.mubr.f32.gmra.mrb[0].mxu0 %v1133
      %v1865 = vpop.f32.mrb[0].mxu0
      %v1866 = vadd.f32 %v1392, %v1865
      %v1867 = vpop.f32.mrb[0].mxu0
      %v1868 = vadd.f32 %v1396, %v1867
      %1869 = vmatprep.mubr.f32.mxu0 %v1136
      %1870 = vmatmul.mubr.f32.gmra.mrb[0].mxu0 %v1135
      %v1871 = vpop.f32.mrb[0].mxu0
      %v1872 = vadd.f32 %v1392, %v1871
      %v1873 = vpop.f32.mrb[0].mxu0
      %v1874 = vadd.f32 %v1396, %v1873
      %1875 = vmatprep.mubr.f32.mxu0 %v1138
      %1876 = vmatmul.mubr.f32.gmra.mrb[0].mxu0 %v1137
      %v1877 = vpop.f32.mrb[0].mxu0
      %v1878 = vadd.f32 %v1392, %v1877
      %v1879 = vpop.f32.mrb[0].mxu0
      %v1880 = vadd.f32 %v1396, %v1879
      %1881 = vmatprep.mubr.f32.mxu0 %v1140
      %1882 = vmatmul.mubr.f32.gmra.mrb[0].mxu0 %v1139
      %v1883 = vpop.f32.mrb[0].mxu0
      %v1884 = vadd.f32 %v1392, %v1883
      %v1885 = vpop.f32.mrb[0].mxu0
      %v1886 = vadd.f32 %v1396, %v1885
      %1887 = vmatprep.mubr.f32.mxu0 %v1142
      %1888 = vmatmul.mubr.f32.gmra.mrb[0].mxu0 %v1141
      %v1889 = vpop.f32.mrb[0].mxu0
      %v1890 = vadd.f32 %v1392, %v1889
      %v1891 = vpop.f32.mrb[0].mxu0
      %v1892 = vadd.f32 %v1396, %v1891
      %1893 = vmatprep.mubr.f32.mxu0 %v1144
      %1894 = vmatmul.mubr.f32.gmra.mrb[0].mxu0 %v1143
      %v1895 = vpop.f32.mrb[0].mxu0
      %v1896 = vadd.f32 %v1392, %v1895
      %v1897 = vpop.f32.mrb[0].mxu0
      %v1898 = vadd.f32 %v1396, %v1897
      %1899 = vmatprep.mubr.f32.mxu0 %v1146
      %1900 = vmatmul.mubr.f32.gmra.mrb[0].mxu0 %v1145
      %v1901 = vpop.f32.mrb[0].mxu0
      %v1902 = vadd.f32 %v1392, %v1901
      %v1903 = vpop.f32.mrb[0].mxu0
      %v1904 = vadd.f32 %v1396, %v1903
      %1905 = vmatprep.mubr.f32.mxu0 %v1148
      %1906 = vmatmul.mubr.f32.gmra.mrb[0].mxu0 %v1147
      %v1907 = vpop.f32.mrb[0].mxu0
      %v1908 = vadd.f32 %v1392, %v1907
      %v1909 = vpop.f32.mrb[0].mxu0
      %v1910 = vadd.f32 %v1396, %v1909
      %1911 = vmatprep.mubr.f32.mxu0 %v1150
      %1912 = vmatmul.mubr.f32.gmra.mrb[0].mxu0 %v1149
      %v1913 = vpop.f32.mrb[0].mxu0
      %v1914 = vadd.f32 %v1392, %v1913
      %v1915 = vpop.f32.mrb[0].mxu0
      %v1916 = vadd.f32 %v1396, %v1915
      %1917 = vmatprep.mubr.f32.mxu0 %v1152
      %1918 = vmatmul.mubr.f32.gmra.mrb[0].mxu0 %v1151
      %v1919 = vpop.f32.mrb[0].mxu0
      %v1920 = vadd.f32 %v1392, %v1919
      %v1921 = vpop.f32.mrb[0].mxu0
      %v1922 = vadd.f32 %v1396, %v1921
      %1923 = vmatprep.mubr.f32.mxu0 %v1154
      %1924 = vmatmul.mubr.f32.gmra.mrb[0].mxu0 %v1153
      %v1925 = vpop.f32.mrb[0].mxu0
      %v1926 = vadd.f32 %v1392, %v1925
      %v1927 = vpop.f32.mrb[0].mxu0
      %v1928 = vadd.f32 %v1396, %v1927
      %1929 = vdwg.mxu0
      %1930 = vmatprep.subr.mxu0 %v1160
      %1931 = vmatpush1.msra.mxu0 %v1159
      %1932 = vmatprep.subr.mxu0 %v1167
      %1933 = vmatpush1.msra.mxu0 %v1166
      %1934 = vmatprep.subr.mxu0 %v1174
      %1935 = vmatpush1.msra.mxu0 %v1173
      %1936 = vmatprep.subr.mxu0 %v1181
      %1937 = vmatpush1.msra.mxu0 %v1180
      %1938 = vmatprep.subr.mxu0 %v1188
      %1939 = vmatpush1.msra.mxu0 %v1187
      %1940 = vmatprep.subr.mxu0 %v1195
      %1941 = vmatpush1.msra.mxu0 %v1194
      %1942 = vmatprep.subr.mxu0 %v1202
      %1943 = vmatpush1.msra.mxu0 %v1201
      %1944 = vmatprep.subr.mxu0 %v1209
      %1945 = vmatpush1.msra.mxu0 %v1208
      %1946 = vmatprep.subr.mxu0 %v1216
      %1947 = vmatpush1.msra.mxu0 %v1215
      %1948 = vmatprep.subr.mxu0 %v1223
      %1949 = vmatpush1.msra.mxu0 %v1222
      %1950 = vmatprep.subr.mxu0 %v1230
      %1951 = vmatpush1.msra.mxu0 %v1229
      %1952 = vmatprep.subr.mxu0 %v1237
      %1953 = vmatpush1.msra.mxu0 %v1236
      %1954 = vmatprep.subr.mxu0 %v1244
      %1955 = vmatpush1.msra.mxu0 %v1243
      %1956 = vmatprep.subr.mxu0 %v1251
      %1957 = vmatpush1.msra.mxu0 %v1250
      %1958 = vmatprep.subr.mxu0 %v1258
      %1959 = vmatpush1.msra.mxu0 %v1257
      %1960 = vmatprep.subr.mxu0 %v1265
      %1961 = vmatpush1.msra.mxu0 %v1264
      %1962 = vmatprep.subr.mxu0 %v1272
      %1963 = vmatpush1.msra.mxu0 %v1271
      %1964 = vmatprep.subr.mxu0 %v1279
      %1965 = vmatpush1.msra.mxu0 %v1278
      %1966 = vmatprep.subr.mxu0 %v1286
      %1967 = vmatpush1.msra.mxu0 %v1285
      %1968 = vmatprep.subr.mxu0 %v1293
      %1969 = vmatpush1.msra.mxu0 %v1292
      %1970 = vmatprep.subr.mxu0 %v1300
      %1971 = vmatpush1.msra.mxu0 %v1299
      %1972 = vmatprep.subr.mxu0 %v1307
      %1973 = vmatpush1.msra.mxu0 %v1306
      %1974 = vmatprep.subr.mxu0 %v1314
      %1975 = vmatpush1.msra.mxu0 %v1313
      %1976 = vmatprep.subr.mxu0 %v1321
      %1977 = vmatpush1.msra.mxu0 %v1320
      %1978 = vmatprep.subr.mxu0 %v1328
      %1979 = vmatpush1.msra.mxu0 %v1327
      %1980 = vmatprep.subr.mxu0 %v1335
      %1981 = vmatpush1.msra.mxu0 %v1334
      %1982 = vmatprep.subr.mxu0 %v1342
      %1983 = vmatpush1.msra.mxu0 %v1341
      %1984 = vmatprep.subr.mxu0 %v1349
      %1985 = vmatpush1.msra.mxu0 %v1348
      %1986 = vmatprep.subr.mxu0 %v1356
      %1987 = vmatpush1.msra.mxu0 %v1355
      %1988 = vmatprep.subr.mxu0 %v1363
      %1989 = vmatpush1.msra.mxu0 %v1362
      %1990 = vmatprep.subr.mxu0 %v1370
      %1991 = vmatpush1.msra.mxu0 %v1369
      %1992 = vmatprep.subr.mxu0 %v1377
      %1993 = vmatpush1.msra.mxu0 %v1376
      %1994 = vmatprep.mubr.f32.mxu0 %v1092
      %1995 = vmatmul.mubr.f32.gmra.mrb[0].mxu0 %v1091
      %v1996 = vpop.f32.mrb[0].mxu0
      %v1997 = vadd.f32 %v1400, %v1996
      %v1998 = vpop.f32.mrb[0].mxu0
      %v1999 = vadd.f32 %v1404, %v1998
      %2000 = vmatprep.mubr.f32.mxu0 %v1094
      %2001 = vmatmul.mubr.f32.gmra.mrb[0].mxu0 %v1093
      %v2002 = vpop.f32.mrb[0].mxu0
      %v2003 = vadd.f32 %v1400, %v2002
      %v2004 = vpop.f32.mrb[0].mxu0
      %v2005 = vadd.f32 %v1404, %v2004
      %2006 = vmatprep.mubr.f32.mxu0 %v1096
      %2007 = vmatmul.mubr.f32.gmra.mrb[0].mxu0 %v1095
      %v2008 = vpop.f32.mrb[0].mxu0
      %v2009 = vadd.f32 %v1400, %v2008
      %v2010 = vpop.f32.mrb[0].mxu0
      %v2011 = vadd.f32 %v1404, %v2010
      %2012 = vmatprep.mubr.f32.mxu0 %v1098
      %2013 = vmatmul.mubr.f32.gmra.mrb[0].mxu0 %v1097
      %v2014 = vpop.f32.mrb[0].mxu0
      %v2015 = vadd.f32 %v1400, %v2014
      %v2016 = vpop.f32.mrb[0].mxu0
      %v2017 = vadd.f32 %v1404, %v2016
      %2018 = vmatprep.mubr.f32.mxu0 %v1100
      %2019 = vmatmul.mubr.f32.gmra.mrb[0].mxu0 %v1099
      %v2020 = vpop.f32.mrb[0].mxu0
      %v2021 = vadd.f32 %v1400, %v2020
      %v2022 = vpop.f32.mrb[0].mxu0
      %v2023 = vadd.f32 %v1404, %v2022
      %2024 = vmatprep.mubr.f32.mxu0 %v1102
      %2025 = vmatmul.mubr.f32.gmra.mrb[0].mxu0 %v1101
      %v2026 = vpop.f32.mrb[0].mxu0
      %v2027 = vadd.f32 %v1400, %v2026
      %v2028 = vpop.f32.mrb[0].mxu0
      %v2029 = vadd.f32 %v1404, %v2028
      %2030 = vmatprep.mubr.f32.mxu0 %v1104
      %2031 = vmatmul.mubr.f32.gmra.mrb[0].mxu0 %v1103
      %v2032 = vpop.f32.mrb[0].mxu0
      %v2033 = vadd.f32 %v1400, %v2032
      %v2034 = vpop.f32.mrb[0].mxu0
      %v2035 = vadd.f32 %v1404, %v2034
      %2036 = vmatprep.mubr.f32.mxu0 %v1106
      %2037 = vmatmul.mubr.f32.gmra.mrb[0].mxu0 %v1105
      %v2038 = vpop.f32.mrb[0].mxu0
      %v2039 = vadd.f32 %v1400, %v2038
      %v2040 = vpop.f32.mrb[0].mxu0
      %v2041 = vadd.f32 %v1404, %v2040
      %2042 = vmatprep.mubr.f32.mxu0 %v1108
      %2043 = vmatmul.mubr.f32.gmra.mrb[0].mxu0 %v1107
      %v2044 = vpop.f32.mrb[0].mxu0
      %v2045 = vadd.f32 %v1400, %v2044
      %v2046 = vpop.f32.mrb[0].mxu0
      %v2047 = vadd.f32 %v1404, %v2046
      %2048 = vmatprep.mubr.f32.mxu0 %v1110
      %2049 = vmatmul.mubr.f32.gmra.mrb[0].mxu0 %v1109
      %v2050 = vpop.f32.mrb[0].mxu0
      %v2051 = vadd.f32 %v1400, %v2050
      %v2052 = vpop.f32.mrb[0].mxu0
      %v2053 = vadd.f32 %v1404, %v2052
      %2054 = vmatprep.mubr.f32.mxu0 %v1112
      %2055 = vmatmul.mubr.f32.gmra.mrb[0].mxu0 %v1111
      %v2056 = vpop.f32.mrb[0].mxu0
      %v2057 = vadd.f32 %v1400, %v2056
      %v2058 = vpop.f32.mrb[0].mxu0
      %v2059 = vadd.f32 %v1404, %v2058
      %2060 = vmatprep.mubr.f32.mxu0 %v1114
      %2061 = vmatmul.mubr.f32.gmra.mrb[0].mxu0 %v1113
      %v2062 = vpop.f32.mrb[0].mxu0
      %v2063 = vadd.f32 %v1400, %v2062
      %v2064 = vpop.f32.mrb[0].mxu0
      %v2065 = vadd.f32 %v1404, %v2064
      %2066 = vmatprep.mubr.f32.mxu0 %v1116
      %2067 = vmatmul.mubr.f32.gmra.mrb[0].mxu0 %v1115
      %v2068 = vpop.f32.mrb[0].mxu0
      %v2069 = vadd.f32 %v1400, %v2068
      %v2070 = vpop.f32.mrb[0].mxu0
      %v2071 = vadd.f32 %v1404, %v2070
      %2072 = vmatprep.mubr.f32.mxu0 %v1118
      %2073 = vmatmul.mubr.f32.gmra.mrb[0].mxu0 %v1117
      %v2074 = vpop.f32.mrb[0].mxu0
      %v2075 = vadd.f32 %v1400, %v2074
      %v2076 = vpop.f32.mrb[0].mxu0
      %v2077 = vadd.f32 %v1404, %v2076
      %2078 = vmatprep.mubr.f32.mxu0 %v1120
      %2079 = vmatmul.mubr.f32.gmra.mrb[0].mxu0 %v1119
      %v2080 = vpop.f32.mrb[0].mxu0
      %v2081 = vadd.f32 %v1400, %v2080
      %v2082 = vpop.f32.mrb[0].mxu0
      %v2083 = vadd.f32 %v1404, %v2082
      %2084 = vmatprep.mubr.f32.mxu0 %v1122
      %2085 = vmatmul.mubr.f32.gmra.mrb[0].mxu0 %v1121
      %v2086 = vpop.f32.mrb[0].mxu0
      %v2087 = vadd.f32 %v1400, %v2086
      %v2088 = vpop.f32.mrb[0].mxu0
      %v2089 = vadd.f32 %v1404, %v2088
      %2090 = vmatprep.mubr.f32.mxu0 %v1124
      %2091 = vmatmul.mubr.f32.gmra.mrb[0].mxu0 %v1123
      %v2092 = vpop.f32.mrb[0].mxu0
      %v2093 = vadd.f32 %v1400, %v2092
      %v2094 = vpop.f32.mrb[0].mxu0
      %v2095 = vadd.f32 %v1404, %v2094
      %2096 = vmatprep.mubr.f32.mxu0 %v1126
      %2097 = vmatmul.mubr.f32.gmra.mrb[0].mxu0 %v1125
      %v2098 = vpop.f32.mrb[0].mxu0
      %v2099 = vadd.f32 %v1400, %v2098
      %v2100 = vpop.f32.mrb[0].mxu0
      %v2101 = vadd.f32 %v1404, %v2100
      %2102 = vmatprep.mubr.f32.mxu0 %v1128
      %2103 = vmatmul.mubr.f32.gmra.mrb[0].mxu0 %v1127
      %v2104 = vpop.f32.mrb[0].mxu0
      %v2105 = vadd.f32 %v1400, %v2104
      %v2106 = vpop.f32.mrb[0].mxu0
      %v2107 = vadd.f32 %v1404, %v2106
      %2108 = vmatprep.mubr.f32.mxu0 %v1130
      %2109 = vmatmul.mubr.f32.gmra.mrb[0].mxu0 %v1129
      %v2110 = vpop.f32.mrb[0].mxu0
      %v2111 = vadd.f32 %v1400, %v2110
      %v2112 = vpop.f32.mrb[0].mxu0
      %v2113 = vadd.f32 %v1404, %v2112
      %2114 = vmatprep.mubr.f32.mxu0 %v1132
      %2115 = vmatmul.mubr.f32.gmra.mrb[0].mxu0 %v1131
      %v2116 = vpop.f32.mrb[0].mxu0
      %v2117 = vadd.f32 %v1400, %v2116
      %v2118 = vpop.f32.mrb[0].mxu0
      %v2119 = vadd.f32 %v1404, %v2118
      %2120 = vmatprep.mubr.f32.mxu0 %v1134
      %2121 = vmatmul.mubr.f32.gmra.mrb[0].mxu0 %v1133
      %v2122 = vpop.f32.mrb[0].mxu0
      %v2123 = vadd.f32 %v1400, %v2122
      %v2124 = vpop.f32.mrb[0].mxu0
      %v2125 = vadd.f32 %v1404, %v2124
      %2126 = vmatprep.mubr.f32.mxu0 %v1136
      %2127 = vmatmul.mubr.f32.gmra.mrb[0].mxu0 %v1135
      %v2128 = vpop.f32.mrb[0].mxu0
      %v2129 = vadd.f32 %v1400, %v2128
      %v2130 = vpop.f32.mrb[0].mxu0
      %v2131 = vadd.f32 %v1404, %v2130
      %2132 = vmatprep.mubr.f32.mxu0 %v1138
      %2133 = vmatmul.mubr.f32.gmra.mrb[0].mxu0 %v1137
      %v2134 = vpop.f32.mrb[0].mxu0
      %v2135 = vadd.f32 %v1400, %v2134
      %v2136 = vpop.f32.mrb[0].mxu0
      %v2137 = vadd.f32 %v1404, %v2136
      %2138 = vmatprep.mubr.f32.mxu0 %v1140
      %2139 = vmatmul.mubr.f32.gmra.mrb[0].mxu0 %v1139
      %v2140 = vpop.f32.mrb[0].mxu0
      %v2141 = vadd.f32 %v1400, %v2140
      %v2142 = vpop.f32.mrb[0].mxu0
      %v2143 = vadd.f32 %v1404, %v2142
      %2144 = vmatprep.mubr.f32.mxu0 %v1142
      %2145 = vmatmul.mubr.f32.gmra.mrb[0].mxu0 %v1141
      %v2146 = vpop.f32.mrb[0].mxu0
      %v2147 = vadd.f32 %v1400, %v2146
      %v2148 = vpop.f32.mrb[0].mxu0
      %v2149 = vadd.f32 %v1404, %v2148
      %2150 = vmatprep.mubr.f32.mxu0 %v1144
      %2151 = vmatmul.mubr.f32.gmra.mrb[0].mxu0 %v1143
      %v2152 = vpop.f32.mrb[0].mxu0
      %v2153 = vadd.f32 %v1400, %v2152
      %v2154 = vpop.f32.mrb[0].mxu0
      %v2155 = vadd.f32 %v1404, %v2154
      %2156 = vmatprep.mubr.f32.mxu0 %v1146
      %2157 = vmatmul.mubr.f32.gmra.mrb[0].mxu0 %v1145
      %v2158 = vpop.f32.mrb[0].mxu0
      %v2159 = vadd.f32 %v1400, %v2158
      %v2160 = vpop.f32.mrb[0].mxu0
      %v2161 = vadd.f32 %v1404, %v2160
      %2162 = vmatprep.mubr.f32.mxu0 %v1148
      %2163 = vmatmul.mubr.f32.gmra.mrb[0].mxu0 %v1147
      %v2164 = vpop.f32.mrb[0].mxu0
      %v2165 = vadd.f32 %v1400, %v2164
      %v2166 = vpop.f32.mrb[0].mxu0
      %v2167 = vadd.f32 %v1404, %v2166
      %2168 = vmatprep.mubr.f32.mxu0 %v1150
      %2169 = vmatmul.mubr.f32.gmra.mrb[0].mxu0 %v1149
      %v2170 = vpop.f32.mrb[0].mxu0
      %v2171 = vadd.f32 %v1400, %v2170
      %v2172 = vpop.f32.mrb[0].mxu0
      %v2173 = vadd.f32 %v1404, %v2172
      %2174 = vmatprep.mubr.f32.mxu0 %v1152
      %2175 = vmatmul.mubr.f32.gmra.mrb[0].mxu0 %v1151
      %v2176 = vpop.f32.mrb[0].mxu0
      %v2177 = vadd.f32 %v1400, %v2176
      %v2178 = vpop.f32.mrb[0].mxu0
      %v2179 = vadd.f32 %v1404, %v2178
      %2180 = vmatprep.mubr.f32.mxu0 %v1154
      %2181 = vmatmul.mubr.f32.gmra.mrb[0].mxu0 %v1153
      %v2182 = vpop.f32.mrb[0].mxu0
      %v2183 = vadd.f32 %v1400, %v2182
      %v2184 = vpop.f32.mrb[0].mxu0
      %v2185 = vadd.f32 %v1404, %v2184
      %2186 = vdwg.mxu0
      %2187 = vmatprep.subr.mxu0 0.0
      %2188 = vmatpush1.msra.mxu0 %v1161
      %2189 = vmatprep.subr.mxu0 0.0
      %2190 = vmatpush1.msra.mxu0 %v1168
      %2191 = vmatprep.subr.mxu0 0.0
      %2192 = vmatpush1.msra.mxu0 %v1175
      %2193 = vmatprep.subr.mxu0 0.0
      %2194 = vmatpush1.msra.mxu0 %v1182
      %2195 = vmatprep.subr.mxu0 0.0
      %2196 = vmatpush1.msra.mxu0 %v1189
      %2197 = vmatprep.subr.mxu0 0.0
      %2198 = vmatpush1.msra.mxu0 %v1196
      %2199 = vmatprep.subr.mxu0 0.0
      %2200 = vmatpush1.msra.mxu0 %v1203
      %2201 = vmatprep.subr.mxu0 0.0
      %2202 = vmatpush1.msra.mxu0 %v1210
      %2203 = vmatprep.subr.mxu0 0.0
      %2204 = vmatpush1.msra.mxu0 %v1217
      %2205 = vmatprep.subr.mxu0 0.0
      %2206 = vmatpush1.msra.mxu0 %v1224
      %2207 = vmatprep.subr.mxu0 0.0
      %2208 = vmatpush1.msra.mxu0 %v1231
      %2209 = vmatprep.subr.mxu0 0.0
      %2210 = vmatpush1.msra.mxu0 %v1238
      %2211 = vmatprep.subr.mxu0 0.0
      %2212 = vmatpush1.msra.mxu0 %v1245
      %2213 = vmatprep.subr.mxu0 0.0
      %2214 = vmatpush1.msra.mxu0 %v1252
      %2215 = vmatprep.subr.mxu0 0.0
      %2216 = vmatpush1.msra.mxu0 %v1259
      %2217 = vmatprep.subr.mxu0 0.0
      %2218 = vmatpush1.msra.mxu0 %v1266
      %2219 = vmatprep.subr.mxu0 0.0
      %2220 = vmatpush1.msra.mxu0 %v1273
      %2221 = vmatprep.subr.mxu0 0.0
      %2222 = vmatpush1.msra.mxu0 %v1280
      %2223 = vmatprep.subr.mxu0 0.0
      %2224 = vmatpush1.msra.mxu0 %v1287
      %2225 = vmatprep.subr.mxu0 0.0
      %2226 = vmatpush1.msra.mxu0 %v1294
      %2227 = vmatprep.subr.mxu0 0.0
      %2228 = vmatpush1.msra.mxu0 %v1301
      %2229 = vmatprep.subr.mxu0 0.0
      %2230 = vmatpush1.msra.mxu0 %v1308
      %2231 = vmatprep.subr.mxu0 0.0
      %2232 = vmatpush1.msra.mxu0 %v1315
      %2233 = vmatprep.subr.mxu0 0.0
      %2234 = vmatpush1.msra.mxu0 %v1322
      %2235 = vmatprep.subr.mxu0 0.0
      %2236 = vmatpush1.msra.mxu0 %v1329
      %2237 = vmatprep.subr.mxu0 0.0
      %2238 = vmatpush1.msra.mxu0 %v1336
      %2239 = vmatprep.subr.mxu0 0.0
      %2240 = vmatpush1.msra.mxu0 %v1343
      %2241 = vmatprep.subr.mxu0 0.0
      %2242 = vmatpush1.msra.mxu0 %v1350
      %2243 = vmatprep.subr.mxu0 0.0
      %2244 = vmatpush1.msra.mxu0 %v1357
      %2245 = vmatprep.subr.mxu0 0.0
      %2246 = vmatpush1.msra.mxu0 %v1364
      %2247 = vmatprep.subr.mxu0 0.0
      %2248 = vmatpush1.msra.mxu0 %v1371
      %2249 = vmatprep.subr.mxu0 0.0
      %2250 = vmatpush1.msra.mxu0 %v1378
      %2251 = vmatprep.mubr.f32.mxu0 %v1092
      %2252 = vmatmul.mubr.f32.gmra.mrb[0].mxu0 %v1091
      %v2253 = vpop.f32.mrb[0].mxu0
      %v2254 = vadd.f32 %v1408, %v2253
      %v2255 = vpop.f32.mrb[0].mxu0
      %2256 = vmatprep.mubr.f32.mxu0 %v1094
      %2257 = vmatmul.mubr.f32.gmra.mrb[0].mxu0 %v1093
      %v2258 = vpop.f32.mrb[0].mxu0
      %v2259 = vadd.f32 %v1408, %v2258
      %v2260 = vpop.f32.mrb[0].mxu0
      %2261 = vmatprep.mubr.f32.mxu0 %v1096
      %2262 = vmatmul.mubr.f32.gmra.mrb[0].mxu0 %v1095
      %v2263 = vpop.f32.mrb[0].mxu0
      %v2264 = vadd.f32 %v1408, %v2263
      %v2265 = vpop.f32.mrb[0].mxu0
      %2266 = vmatprep.mubr.f32.mxu0 %v1098
      %2267 = vmatmul.mubr.f32.gmra.mrb[0].mxu0 %v1097
      %v2268 = vpop.f32.mrb[0].mxu0
      %v2269 = vadd.f32 %v1408, %v2268
      %v2270 = vpop.f32.mrb[0].mxu0
      %2271 = vmatprep.mubr.f32.mxu0 %v1100
      %2272 = vmatmul.mubr.f32.gmra.mrb[0].mxu0 %v1099
      %v2273 = vpop.f32.mrb[0].mxu0
      %v2274 = vadd.f32 %v1408, %v2273
      %v2275 = vpop.f32.mrb[0].mxu0
      %2276 = vmatprep.mubr.f32.mxu0 %v1102
      %2277 = vmatmul.mubr.f32.gmra.mrb[0].mxu0 %v1101
      %v2278 = vpop.f32.mrb[0].mxu0
      %v2279 = vadd.f32 %v1408, %v2278
      %v2280 = vpop.f32.mrb[0].mxu0
      %2281 = vmatprep.mubr.f32.mxu0 %v1104
      %2282 = vmatmul.mubr.f32.gmra.mrb[0].mxu0 %v1103
      %v2283 = vpop.f32.mrb[0].mxu0
      %v2284 = vadd.f32 %v1408, %v2283
      %v2285 = vpop.f32.mrb[0].mxu0
      %2286 = vmatprep.mubr.f32.mxu0 %v1106
      %2287 = vmatmul.mubr.f32.gmra.mrb[0].mxu0 %v1105
      %v2288 = vpop.f32.mrb[0].mxu0
      %v2289 = vadd.f32 %v1408, %v2288
      %v2290 = vpop.f32.mrb[0].mxu0
      %2291 = vmatprep.mubr.f32.mxu0 %v1108
      %2292 = vmatmul.mubr.f32.gmra.mrb[0].mxu0 %v1107
      %v2293 = vpop.f32.mrb[0].mxu0
      %v2294 = vadd.f32 %v1408, %v2293
      %v2295 = vpop.f32.mrb[0].mxu0
      %2296 = vmatprep.mubr.f32.mxu0 %v1110
      %2297 = vmatmul.mubr.f32.gmra.mrb[0].mxu0 %v1109
      %v2298 = vpop.f32.mrb[0].mxu0
      %v2299 = vadd.f32 %v1408, %v2298
      %v2300 = vpop.f32.mrb[0].mxu0
      %2301 = vmatprep.mubr.f32.mxu0 %v1112
      %2302 = vmatmul.mubr.f32.gmra.mrb[0].mxu0 %v1111
      %v2303 = vpop.f32.mrb[0].mxu0
      %v2304 = vadd.f32 %v1408, %v2303
      %v2305 = vpop.f32.mrb[0].mxu0
      %2306 = vmatprep.mubr.f32.mxu0 %v1114
      %2307 = vmatmul.mubr.f32.gmra.mrb[0].mxu0 %v1113
      %v2308 = vpop.f32.mrb[0].mxu0
      %v2309 = vadd.f32 %v1408, %v2308
      %v2310 = vpop.f32.mrb[0].mxu0
      %2311 = vmatprep.mubr.f32.mxu0 %v1116
      %2312 = vmatmul.mubr.f32.gmra.mrb[0].mxu0 %v1115
      %v2313 = vpop.f32.mrb[0].mxu0
      %v2314 = vadd.f32 %v1408, %v2313
      %v2315 = vpop.f32.mrb[0].mxu0
      %2316 = vmatprep.mubr.f32.mxu0 %v1118
      %2317 = vmatmul.mubr.f32.gmra.mrb[0].mxu0 %v1117
      %v2318 = vpop.f32.mrb[0].mxu0
      %v2319 = vadd.f32 %v1408, %v2318
      %v2320 = vpop.f32.mrb[0].mxu0
      %2321 = vmatprep.mubr.f32.mxu0 %v1120
      %2322 = vmatmul.mubr.f32.gmra.mrb[0].mxu0 %v1119
      %v2323 = vpop.f32.mrb[0].mxu0
      %v2324 = vadd.f32 %v1408, %v2323
      %v2325 = vpop.f32.mrb[0].mxu0
      %2326 = vmatprep.mubr.f32.mxu0 %v1122
      %2327 = vmatmul.mubr.f32.gmra.mrb[0].mxu0 %v1121
      %v2328 = vpop.f32.mrb[0].mxu0
      %v2329 = vadd.f32 %v1408, %v2328
      %v2330 = vpop.f32.mrb[0].mxu0
      %2331 = vmatprep.mubr.f32.mxu0 %v1124
      %2332 = vmatmul.mubr.f32.gmra.mrb[0].mxu0 %v1123
      %v2333 = vpop.f32.mrb[0].mxu0
      %v2334 = vadd.f32 %v1408, %v2333
      %v2335 = vpop.f32.mrb[0].mxu0
      %2336 = vmatprep.mubr.f32.mxu0 %v1126
      %2337 = vmatmul.mubr.f32.gmra.mrb[0].mxu0 %v1125
      %v2338 = vpop.f32.mrb[0].mxu0
      %v2339 = vadd.f32 %v1408, %v2338
      %v2340 = vpop.f32.mrb[0].mxu0
      %2341 = vmatprep.mubr.f32.mxu0 %v1128
      %2342 = vmatmul.mubr.f32.gmra.mrb[0].mxu0 %v1127
      %v2343 = vpop.f32.mrb[0].mxu0
      %v2344 = vadd.f32 %v1408, %v2343
      %v2345 = vpop.f32.mrb[0].mxu0
      %2346 = vmatprep.mubr.f32.mxu0 %v1130
      %2347 = vmatmul.mubr.f32.gmra.mrb[0].mxu0 %v1129
      %v2348 = vpop.f32.mrb[0].mxu0
      %v2349 = vadd.f32 %v1408, %v2348
      %v2350 = vpop.f32.mrb[0].mxu0
      %2351 = vmatprep.mubr.f32.mxu0 %v1132
      %2352 = vmatmul.mubr.f32.gmra.mrb[0].mxu0 %v1131
      %v2353 = vpop.f32.mrb[0].mxu0
      %v2354 = vadd.f32 %v1408, %v2353
      %v2355 = vpop.f32.mrb[0].mxu0
      %2356 = vmatprep.mubr.f32.mxu0 %v1134
      %2357 = vmatmul.mubr.f32.gmra.mrb[0].mxu0 %v1133
      %v2358 = vpop.f32.mrb[0].mxu0
      %v2359 = vadd.f32 %v1408, %v2358
      %v2360 = vpop.f32.mrb[0].mxu0
      %2361 = vmatprep.mubr.f32.mxu0 %v1136
      %2362 = vmatmul.mubr.f32.gmra.mrb[0].mxu0 %v1135
      %v2363 = vpop.f32.mrb[0].mxu0
      %v2364 = vadd.f32 %v1408, %v2363
      %v2365 = vpop.f32.mrb[0].mxu0
      %2366 = vmatprep.mubr.f32.mxu0 %v1138
      %2367 = vmatmul.mubr.f32.gmra.mrb[0].mxu0 %v1137
      %v2368 = vpop.f32.mrb[0].mxu0
      %v2369 = vadd.f32 %v1408, %v2368
      %v2370 = vpop.f32.mrb[0].mxu0
      %2371 = vmatprep.mubr.f32.mxu0 %v1140
      %2372 = vmatmul.mubr.f32.gmra.mrb[0].mxu0 %v1139
      %v2373 = vpop.f32.mrb[0].mxu0
      %v2374 = vadd.f32 %v1408, %v2373
      %v2375 = vpop.f32.mrb[0].mxu0
      %2376 = vmatprep.mubr.f32.mxu0 %v1142
      %2377 = vmatmul.mubr.f32.gmra.mrb[0].mxu0 %v1141
      %v2378 = vpop.f32.mrb[0].mxu0
      %v2379 = vadd.f32 %v1408, %v2378
      %v2380 = vpop.f32.mrb[0].mxu0
      %2381 = vmatprep.mubr.f32.mxu0 %v1144
      %2382 = vmatmul.mubr.f32.gmra.mrb[0].mxu0 %v1143
      %v2383 = vpop.f32.mrb[0].mxu0
      %v2384 = vadd.f32 %v1408, %v2383
      %v2385 = vpop.f32.mrb[0].mxu0
      %2386 = vmatprep.mubr.f32.mxu0 %v1146
      %2387 = vmatmul.mubr.f32.gmra.mrb[0].mxu0 %v1145
      %v2388 = vpop.f32.mrb[0].mxu0
      %v2389 = vadd.f32 %v1408, %v2388
      %v2390 = vpop.f32.mrb[0].mxu0
      %2391 = vmatprep.mubr.f32.mxu0 %v1148
      %2392 = vmatmul.mubr.f32.gmra.mrb[0].mxu0 %v1147
      %v2393 = vpop.f32.mrb[0].mxu0
      %v2394 = vadd.f32 %v1408, %v2393
      %v2395 = vpop.f32.mrb[0].mxu0
      %2396 = vmatprep.mubr.f32.mxu0 %v1150
      %2397 = vmatmul.mubr.f32.gmra.mrb[0].mxu0 %v1149
      %v2398 = vpop.f32.mrb[0].mxu0
      %v2399 = vadd.f32 %v1408, %v2398
      %v2400 = vpop.f32.mrb[0].mxu0
      %2401 = vmatprep.mubr.f32.mxu0 %v1152
      %2402 = vmatmul.mubr.f32.gmra.mrb[0].mxu0 %v1151
      %v2403 = vpop.f32.mrb[0].mxu0
      %v2404 = vadd.f32 %v1408, %v2403
      %v2405 = vpop.f32.mrb[0].mxu0
      %2406 = vmatprep.mubr.f32.mxu0 %v1154
      %2407 = vmatmul.mubr.f32.gmra.mrb[0].mxu0 %v1153
      %v2408 = vpop.f32.mrb[0].mxu0
      %v2409 = vadd.f32 %v1408, %v2408
      %v2410 = vpop.f32.mrb[0].mxu0
      %2411 = vdwg.mxu0
      %v2412 = vtanh.pop %v1483
      %v2413 = vtanh.pop %v1485
      %v2414 = vtanh.pop %v1740
      %v2415 = vtanh.pop %v1742
      %v2416 = vtanh.pop %v1997
      %v2417 = vtanh.pop %v1999
      %v2418 = vtanh.pop %v2254
      %v2419 = vtanh.pop %v1489
      %v2420 = vtanh.pop %v1491
      %v2421 = vtanh.pop %v1746
      %v2422 = vtanh.pop %v1748
      %v2423 = vtanh.pop %v2003
      %v2424 = vtanh.pop %v2005
      %v2425 = vtanh.pop %v2259
      %v2426 = vtanh.pop %v1495
      %v2427 = vtanh.pop %v1497
      %v2428 = vtanh.pop %v1752
      %v2429 = vtanh.pop %v1754
      %v2430 = vtanh.pop %v2009
      %v2431 = vtanh.pop %v2011
      %v2432 = vtanh.pop %v2264
      %v2433 = vtanh.pop %v1501
      %v2434 = vtanh.pop %v1503
      %v2435 = vtanh.pop %v1758
      %v2436 = vtanh.pop %v1760
      %v2437 = vtanh.pop %v2015
      %v2438 = vtanh.pop %v2017
      %v2439 = vtanh.pop %v2269
      %v2440 = vtanh.pop %v1507
      %v2441 = vtanh.pop %v1509
      %v2442 = vtanh.pop %v1764
      %v2443 = vtanh.pop %v1766
      %v2444 = vtanh.pop %v2021
      %v2445 = vtanh.pop %v2023
      %v2446 = vtanh.pop %v2274
      %v2447 = vtanh.pop %v1513
      %v2448 = vtanh.pop %v1515
      %v2449 = vtanh.pop %v1770
      %v2450 = vtanh.pop %v1772
      %v2451 = vtanh.pop %v2027
      %v2452 = vtanh.pop %v2029
      %v2453 = vtanh.pop %v2279
      %v2454 = vtanh.pop %v1519
      %v2455 = vtanh.pop %v1521
      %v2456 = vtanh.pop %v1776
      %v2457 = vtanh.pop %v1778
      %v2458 = vtanh.pop %v2033
      %v2459 = vtanh.pop %v2035
      %v2460 = vtanh.pop %v2284
      %v2461 = vtanh.pop %v1525
      %v2462 = vtanh.pop %v1527
      %v2463 = vtanh.pop %v1782
      %v2464 = vtanh.pop %v1784
      %v2465 = vtanh.pop %v2039
      %v2466 = vtanh.pop %v2041
      %v2467 = vtanh.pop %v2289
      %v2468 = vtanh.pop %v1531
      %v2469 = vtanh.pop %v1533
      %v2470 = vtanh.pop %v1788
      %v2471 = vtanh.pop %v1790
      %v2472 = vtanh.pop %v2045
      %v2473 = vtanh.pop %v2047
      %v2474 = vtanh.pop %v2294
      %v2475 = vtanh.pop %v1537
      %v2476 = vtanh.pop %v1539
      %v2477 = vtanh.pop %v1794
      %v2478 = vtanh.pop %v1796
      %v2479 = vtanh.pop %v2051
      %v2480 = vtanh.pop %v2053
      %v2481 = vtanh.pop %v2299
      %v2482 = vtanh.pop %v1543
      %v2483 = vtanh.pop %v1545
      %v2484 = vtanh.pop %v1800
      %v2485 = vtanh.pop %v1802
      %v2486 = vtanh.pop %v2057
      %v2487 = vtanh.pop %v2059
      %v2488 = vtanh.pop %v2304
      %v2489 = vtanh.pop %v1549
      %v2490 = vtanh.pop %v1551
      %v2491 = vtanh.pop %v1806
      %v2492 = vtanh.pop %v1808
      %v2493 = vtanh.pop %v2063
      %v2494 = vtanh.pop %v2065
      %v2495 = vtanh.pop %v2309
      %v2496 = vtanh.pop %v1555
      %v2497 = vtanh.pop %v1557
      %v2498 = vtanh.pop %v1812
      %v2499 = vtanh.pop %v1814
      %v2500 = vtanh.pop %v2069
      %v2501 = vtanh.pop %v2071
      %v2502 = vtanh.pop %v2314
      %v2503 = vtanh.pop %v1561
      %v2504 = vtanh.pop %v1563
      %v2505 = vtanh.pop %v1818
      %v2506 = vtanh.pop %v1820
      %v2507 = vtanh.pop %v2075
      %v2508 = vtanh.pop %v2077
      %v2509 = vtanh.pop %v2319
      %v2510 = vtanh.pop %v1567
      %v2511 = vtanh.pop %v1569
      %v2512 = vtanh.pop %v1824
      %v2513 = vtanh.pop %v1826
      %v2514 = vtanh.pop %v2081
      %v2515 = vtanh.pop %v2083
      %v2516 = vtanh.pop %v2324
      %v2517 = vtanh.pop %v1573
      %v2518 = vtanh.pop %v1575
      %v2519 = vtanh.pop %v1830
      %v2520 = vtanh.pop %v1832
      %v2521 = vtanh.pop %v2087
      %v2522 = vtanh.pop %v2089
      %v2523 = vtanh.pop %v2329
      %v2524 = vtanh.pop %v1579
      %v2525 = vtanh.pop %v1581
      %v2526 = vtanh.pop %v1836
      %v2527 = vtanh.pop %v1838
      %v2528 = vtanh.pop %v2093
      %v2529 = vtanh.pop %v2095
      %v2530 = vtanh.pop %v2334
      %v2531 = vtanh.pop %v1585
      %v2532 = vtanh.pop %v1587
      %v2533 = vtanh.pop %v1842
      %v2534 = vtanh.pop %v1844
      %v2535 = vtanh.pop %v2099
      %v2536 = vtanh.pop %v2101
      %v2537 = vtanh.pop %v2339
      %v2538 = vtanh.pop %v1591
      %v2539 = vtanh.pop %v1593
      %v2540 = vtanh.pop %v1848
      %v2541 = vtanh.pop %v1850
      %v2542 = vtanh.pop %v2105
      %v2543 = vtanh.pop %v2107
      %v2544 = vtanh.pop %v2344
      %v2545 = vtanh.pop %v1597
      %v2546 = vtanh.pop %v1599
      %v2547 = vtanh.pop %v1854
      %v2548 = vtanh.pop %v1856
      %v2549 = vtanh.pop %v2111
      %v2550 = vtanh.pop %v2113
      %v2551 = vtanh.pop %v2349
      %v2552 = vtanh.pop %v1603
      %v2553 = vtanh.pop %v1605
      %v2554 = vtanh.pop %v1860
      %v2555 = vtanh.pop %v1862
      %v2556 = vtanh.pop %v2117
      %v2557 = vtanh.pop %v2119
      %v2558 = vtanh.pop %v2354
      %v2559 = vtanh.pop %v1609
      %v2560 = vtanh.pop %v1611
      %v2561 = vtanh.pop %v1866
      %v2562 = vtanh.pop %v1868
      %v2563 = vtanh.pop %v2123
      %v2564 = vtanh.pop %v2125
      %v2565 = vtanh.pop %v2359
      %v2566 = vtanh.pop %v1615
      %v2567 = vtanh.pop %v1617
      %v2568 = vtanh.pop %v1872
      %v2569 = vtanh.pop %v1874
      %v2570 = vtanh.pop %v2129
      %v2571 = vtanh.pop %v2131
      %v2572 = vtanh.pop %v2364
      %v2573 = vtanh.pop %v1621
      %v2574 = vtanh.pop %v1623
      %v2575 = vtanh.pop %v1878
      %v2576 = vtanh.pop %v1880
      %v2577 = vtanh.pop %v2135
      %v2578 = vtanh.pop %v2137
      %v2579 = vtanh.pop %v2369
      %v2580 = vtanh.pop %v1627
      %v2581 = vtanh.pop %v1629
      %v2582 = vtanh.pop %v1884
      %v2583 = vtanh.pop %v1886
      %v2584 = vtanh.pop %v2141
      %v2585 = vtanh.pop %v2143
      %v2586 = vtanh.pop %v2374
      %v2587 = vtanh.pop %v1633
      %v2588 = vtanh.pop %v1635
      %v2589 = vtanh.pop %v1890
      %v2590 = vtanh.pop %v1892
      %v2591 = vtanh.pop %v2147
      %v2592 = vtanh.pop %v2149
      %v2593 = vtanh.pop %v2379
      %v2594 = vtanh.pop %v1639
      %v2595 = vtanh.pop %v1641
      %v2596 = vtanh.pop %v1896
      %v2597 = vtanh.pop %v1898
      %v2598 = vtanh.pop %v2153
      %v2599 = vtanh.pop %v2155
      %v2600 = vtanh.pop %v2384
      %v2601 = vtanh.pop %v1645
      %v2602 = vtanh.pop %v1647
      %v2603 = vtanh.pop %v1902
      %v2604 = vtanh.pop %v1904
      %v2605 = vtanh.pop %v2159
      %v2606 = vtanh.pop %v2161
      %v2607 = vtanh.pop %v2389
      %v2608 = vtanh.pop %v1651
      %v2609 = vtanh.pop %v1653
      %v2610 = vtanh.pop %v1908
      %v2611 = vtanh.pop %v1910
      %v2612 = vtanh.pop %v2165
      %v2613 = vtanh.pop %v2167
      %v2614 = vtanh.pop %v2394
      %v2615 = vtanh.pop %v1657
      %v2616 = vtanh.pop %v1659
      %v2617 = vtanh.pop %v1914
      %v2618 = vtanh.pop %v1916
      %v2619 = vtanh.pop %v2171
      %v2620 = vtanh.pop %v2173
      %v2621 = vtanh.pop %v2399
      %v2622 = vtanh.pop %v1663
      %v2623 = vtanh.pop %v1665
      %v2624 = vtanh.pop %v1920
      %v2625 = vtanh.pop %v1922
      %v2626 = vtanh.pop %v2177
      %v2627 = vtanh.pop %v2179
      %v2628 = vtanh.pop %v2404
      %v2629 = vtanh.pop %v1669
      %v2630 = vtanh.pop %v1671
      %v2631 = vtanh.pop %v1926
      %v2632 = vtanh.pop %v1928
      %v2633 = vtanh.pop %v2183
      %v2634 = vtanh.pop %v2185
      %v2635 = vtanh.pop %v2409
      %2636 = vst [vmem:[%s282] sm:$0xff] %v2412
      %2637 = vst [vmem:[%s282 + $0x8] sm:$0xff] %v2413
      %2638 = vst [vmem:[%s282 + $0x10] sm:$0xff] %v2414
      %2639 = vst [vmem:[%s282 + $0x18] sm:$0xff] %v2415
      %2640 = vst [vmem:[%s282 + $0x20] sm:$0xff] %v2416
      %2641 = vst [vmem:[%s282 + $0x28] sm:$0xff] %v2417
      %vm2642 = vcmask 130048
      %2643 = vst.msk [vmem:[%s282 + $0x30] sm:$0xff] %vm2642, %v2418
      %2644 = vst [vmem:[%s282 + $0x38] sm:$0xff] %v2419
      %2645 = vst [vmem:[%s282 + $0x40] sm:$0xff] %v2420
      %2646 = vst [vmem:[%s282 + $0x48] sm:$0xff] %v2421
      %2647 = vst [vmem:[%s282 + $0x50] sm:$0xff] %v2422
      %2648 = vst [vmem:[%s282 + $0x58] sm:$0xff] %v2423
      %2649 = vst [vmem:[%s282 + $0x60] sm:$0xff] %v2424
      %2650 = vst.msk [vmem:[%s282 + $0x68] sm:$0xff] %vm2642, %v2425
      %2651 = vst [vmem:[%s282 + $0x70] sm:$0xff] %v2426
      %2652 = vst [vmem:[%s282 + $0x78] sm:$0xff] %v2427
      %2653 = vst [vmem:[%s282 + $0x80] sm:$0xff] %v2428
      %2654 = vst [vmem:[%s282 + $0x88] sm:$0xff] %v2429
      %2655 = vst [vmem:[%s282 + $0x90] sm:$0xff] %v2430
      %2656 = vst [vmem:[%s282 + $0x98] sm:$0xff] %v2431
      %2657 = vst.msk [vmem:[%s282 + $0xa0] sm:$0xff] %vm2642, %v2432
      %2658 = vst [vmem:[%s282 + $0xa8] sm:$0xff] %v2433
      %2659 = vst [vmem:[%s282 + $0xb0] sm:$0xff] %v2434
      %2660 = vst [vmem:[%s282 + $0xb8] sm:$0xff] %v2435
      %2661 = vst [vmem:[%s282 + $0xc0] sm:$0xff] %v2436
      %2662 = vst [vmem:[%s282 + $0xc8] sm:$0xff] %v2437
      %2663 = vst [vmem:[%s282 + $0xd0] sm:$0xff] %v2438
      %2664 = vst.msk [vmem:[%s282 + $0xd8] sm:$0xff] %vm2642, %v2439
      %2665 = vst [vmem:[%s282 + $0xe0] sm:$0xff] %v2440
      %2666 = vst [vmem:[%s282 + $0xe8] sm:$0xff] %v2441
      %2667 = vst [vmem:[%s282 + $0xf0] sm:$0xff] %v2442
      %2668 = vst [vmem:[%s282 + $0xf8] sm:$0xff] %v2443
      %2669 = vst [vmem:[%s282 + $0x100] sm:$0xff] %v2444
      %2670 = vst [vmem:[%s282 + $0x108] sm:$0xff] %v2445
      %2671 = vst.msk [vmem:[%s282 + $0x110] sm:$0xff] %vm2642, %v2446
      %2672 = vst [vmem:[%s282 + $0x118] sm:$0xff] %v2447
      %2673 = vst [vmem:[%s282 + $0x120] sm:$0xff] %v2448
      %2674 = vst [vmem:[%s282 + $0x128] sm:$0xff] %v2449
      %2675 = vst [vmem:[%s282 + $0x130] sm:$0xff] %v2450
      %2676 = vst [vmem:[%s282 + $0x138] sm:$0xff] %v2451
      %2677 = vst [vmem:[%s282 + $0x140] sm:$0xff] %v2452
      %2678 = vst.msk [vmem:[%s282 + $0x148] sm:$0xff] %vm2642, %v2453
      %2679 = vst [vmem:[%s282 + $0x150] sm:$0xff] %v2454
      %2680 = vst [vmem:[%s282 + $0x158] sm:$0xff] %v2455
      %2681 = vst [vmem:[%s282 + $0x160] sm:$0xff] %v2456
      %2682 = vst [vmem:[%s282 + $0x168] sm:$0xff] %v2457
      %2683 = vst [vmem:[%s282 + $0x170] sm:$0xff] %v2458
      %2684 = vst [vmem:[%s282 + $0x178] sm:$0xff] %v2459
      %2685 = vst.msk [vmem:[%s282 + $0x180] sm:$0xff] %vm2642, %v2460
      %2686 = vst [vmem:[%s282 + $0x188] sm:$0xff] %v2461
      %2687 = vst [vmem:[%s282 + $0x190] sm:$0xff] %v2462
      %2688 = vst [vmem:[%s282 + $0x198] sm:$0xff] %v2463
      %2689 = vst [vmem:[%s282 + $0x1a0] sm:$0xff] %v2464
      %2690 = vst [vmem:[%s282 + $0x1a8] sm:$0xff] %v2465
      %2691 = vst [vmem:[%s282 + $0x1b0] sm:$0xff] %v2466
      %2692 = vst.msk [vmem:[%s282 + $0x1b8] sm:$0xff] %vm2642, %v2467
      %2693 = vst [vmem:[%s282 + $0x1c0] sm:$0xff] %v2468
      %2694 = vst [vmem:[%s282 + $0x1c8] sm:$0xff] %v2469
      %2695 = vst [vmem:[%s282 + $0x1d0] sm:$0xff] %v2470
      %2696 = vst [vmem:[%s282 + $0x1d8] sm:$0xff] %v2471
      %2697 = vst [vmem:[%s282 + $0x1e0] sm:$0xff] %v2472
      %2698 = vst [vmem:[%s282 + $0x1e8] sm:$0xff] %v2473
      %2699 = vst.msk [vmem:[%s282 + $0x1f0] sm:$0xff] %vm2642, %v2474
      %2700 = vst [vmem:[%s282 + $0x1f8] sm:$0xff] %v2475
      %2701 = vst [vmem:[%s282 + $0x200] sm:$0xff] %v2476
      %2702 = vst [vmem:[%s282 + $0x208] sm:$0xff] %v2477
      %2703 = vst [vmem:[%s282 + $0x210] sm:$0xff] %v2478
      %2704 = vst [vmem:[%s282 + $0x218] sm:$0xff] %v2479
      %2705 = vst [vmem:[%s282 + $0x220] sm:$0xff] %v2480
      %2706 = vst.msk [vmem:[%s282 + $0x228] sm:$0xff] %vm2642, %v2481
      %2707 = vst [vmem:[%s282 + $0x230] sm:$0xff] %v2482
      %2708 = vst [vmem:[%s282 + $0x238] sm:$0xff] %v2483
      %2709 = vst [vmem:[%s282 + $0x240] sm:$0xff] %v2484
      %2710 = vst [vmem:[%s282 + $0x248] sm:$0xff] %v2485
      %2711 = vst [vmem:[%s282 + $0x250] sm:$0xff] %v2486
      %2712 = vst [vmem:[%s282 + $0x258] sm:$0xff] %v2487
      %2713 = vst.msk [vmem:[%s282 + $0x260] sm:$0xff] %vm2642, %v2488
      %2714 = vst [vmem:[%s282 + $0x268] sm:$0xff] %v2489
      %2715 = vst [vmem:[%s282 + $0x270] sm:$0xff] %v2490
      %2716 = vst [vmem:[%s282 + $0x278] sm:$0xff] %v2491
      %2717 = vst [vmem:[%s282 + $0x280] sm:$0xff] %v2492
      %2718 = vst [vmem:[%s282 + $0x288] sm:$0xff] %v2493
      %2719 = vst [vmem:[%s282 + $0x290] sm:$0xff] %v2494
      %2720 = vst.msk [vmem:[%s282 + $0x298] sm:$0xff] %vm2642, %v2495
      %2721 = vst [vmem:[%s282 + $0x2a0] sm:$0xff] %v2496
      %2722 = vst [vmem:[%s282 + $0x2a8] sm:$0xff] %v2497
      %2723 = vst [vmem:[%s282 + $0x2b0] sm:$0xff] %v2498
      %2724 = vst [vmem:[%s282 + $0x2b8] sm:$0xff] %v2499
      %2725 = vst [vmem:[%s282 + $0x2c0] sm:$0xff] %v2500
      %2726 = vst [vmem:[%s282 + $0x2c8] sm:$0xff] %v2501
      %2727 = vst.msk [vmem:[%s282 + $0x2d0] sm:$0xff] %vm2642, %v2502
      %2728 = vst [vmem:[%s282 + $0x2d8] sm:$0xff] %v2503
      %2729 = vst [vmem:[%s282 + $0x2e0] sm:$0xff] %v2504
      %2730 = vst [vmem:[%s282 + $0x2e8] sm:$0xff] %v2505
      %2731 = vst [vmem:[%s282 + $0x2f0] sm:$0xff] %v2506
      %2732 = vst [vmem:[%s282 + $0x2f8] sm:$0xff] %v2507
      %2733 = vst [vmem:[%s282 + $0x300] sm:$0xff] %v2508
      %2734 = vst.msk [vmem:[%s282 + $0x308] sm:$0xff] %vm2642, %v2509
      %2735 = vst [vmem:[%s282 + $0x310] sm:$0xff] %v2510
      %2736 = vst [vmem:[%s282 + $0x318] sm:$0xff] %v2511
      %2737 = vst [vmem:[%s282 + $0x320] sm:$0xff] %v2512
      %2738 = vst [vmem:[%s282 + $0x328] sm:$0xff] %v2513
      %2739 = vst [vmem:[%s282 + $0x330] sm:$0xff] %v2514
      %2740 = vst [vmem:[%s282 + $0x338] sm:$0xff] %v2515
      %2741 = vst.msk [vmem:[%s282 + $0x340] sm:$0xff] %vm2642, %v2516
      %2742 = vst [vmem:[%s282 + $0x348] sm:$0xff] %v2517
      %2743 = vst [vmem:[%s282 + $0x350] sm:$0xff] %v2518
      %2744 = vst [vmem:[%s282 + $0x358] sm:$0xff] %v2519
      %2745 = vst [vmem:[%s282 + $0x360] sm:$0xff] %v2520
      %2746 = vst [vmem:[%s282 + $0x368] sm:$0xff] %v2521
      %2747 = vst [vmem:[%s282 + $0x370] sm:$0xff] %v2522
      %2748 = vst.msk [vmem:[%s282 + $0x378] sm:$0xff] %vm2642, %v2523
      %2749 = vst [vmem:[%s282 + $0x380] sm:$0xff] %v2524
      %2750 = vst [vmem:[%s282 + $0x388] sm:$0xff] %v2525
      %2751 = vst [vmem:[%s282 + $0x390] sm:$0xff] %v2526
      %2752 = vst [vmem:[%s282 + $0x398] sm:$0xff] %v2527
      %2753 = vst [vmem:[%s282 + $0x3a0] sm:$0xff] %v2528
      %2754 = vst [vmem:[%s282 + $0x3a8] sm:$0xff] %v2529
      %2755 = vst.msk [vmem:[%s282 + $0x3b0] sm:$0xff] %vm2642, %v2530
      %2756 = vst [vmem:[%s282 + $0x3b8] sm:$0xff] %v2531
      %2757 = vst [vmem:[%s282 + $0x3c0] sm:$0xff] %v2532
      %2758 = vst [vmem:[%s282 + $0x3c8] sm:$0xff] %v2533
      %2759 = vst [vmem:[%s282 + $0x3d0] sm:$0xff] %v2534
      %2760 = vst [vmem:[%s282 + $0x3d8] sm:$0xff] %v2535
      %2761 = vst [vmem:[%s282 + $0x3e0] sm:$0xff] %v2536
      %2762 = vst.msk [vmem:[%s282 + $0x3e8] sm:$0xff] %vm2642, %v2537
      %2763 = vst [vmem:[%s282 + $0x3f0] sm:$0xff] %v2538
      %2764 = vst [vmem:[%s282 + $0x3f8] sm:$0xff] %v2539
      %2765 = vst [vmem:[%s282 + $0x400] sm:$0xff] %v2540
      %2766 = vst [vmem:[%s282 + $0x408] sm:$0xff] %v2541
      %2767 = vst [vmem:[%s282 + $0x410] sm:$0xff] %v2542
      %2768 = vst [vmem:[%s282 + $0x418] sm:$0xff] %v2543
      %2769 = vst.msk [vmem:[%s282 + $0x420] sm:$0xff] %vm2642, %v2544
      %2770 = vst [vmem:[%s282 + $0x428] sm:$0xff] %v2545
      %2771 = vst [vmem:[%s282 + $0x430] sm:$0xff] %v2546
      %2772 = vst [vmem:[%s282 + $0x438] sm:$0xff] %v2547
      %2773 = vst [vmem:[%s282 + $0x440] sm:$0xff] %v2548
      %2774 = vst [vmem:[%s282 + $0x448] sm:$0xff] %v2549
      %2775 = vst [vmem:[%s282 + $0x450] sm:$0xff] %v2550
      %2776 = vst.msk [vmem:[%s282 + $0x458] sm:$0xff] %vm2642, %v2551
      %2777 = vst [vmem:[%s282 + $0x460] sm:$0xff] %v2552
      %2778 = vst [vmem:[%s282 + $0x468] sm:$0xff] %v2553
      %2779 = vst [vmem:[%s282 + $0x470] sm:$0xff] %v2554
      %2780 = vst [vmem:[%s282 + $0x478] sm:$0xff] %v2555
      %2781 = vst [vmem:[%s282 + $0x480] sm:$0xff] %v2556
      %2782 = vst [vmem:[%s282 + $0x488] sm:$0xff] %v2557
      %2783 = vst.msk [vmem:[%s282 + $0x490] sm:$0xff] %vm2642, %v2558
      %2784 = vst [vmem:[%s282 + $0x498] sm:$0xff] %v2559
      %2785 = vst [vmem:[%s282 + $0x4a0] sm:$0xff] %v2560
      %2786 = vst [vmem:[%s282 + $0x4a8] sm:$0xff] %v2561
      %2787 = vst [vmem:[%s282 + $0x4b0] sm:$0xff] %v2562
      %2788 = vst [vmem:[%s282 + $0x4b8] sm:$0xff] %v2563
      %2789 = vst [vmem:[%s282 + $0x4c0] sm:$0xff] %v2564
      %2790 = vst.msk [vmem:[%s282 + $0x4c8] sm:$0xff] %vm2642, %v2565
      %2791 = vst [vmem:[%s282 + $0x4d0] sm:$0xff] %v2566
      %2792 = vst [vmem:[%s282 + $0x4d8] sm:$0xff] %v2567
      %2793 = vst [vmem:[%s282 + $0x4e0] sm:$0xff] %v2568
      %2794 = vst [vmem:[%s282 + $0x4e8] sm:$0xff] %v2569
      %2795 = vst [vmem:[%s282 + $0x4f0] sm:$0xff] %v2570
      %2796 = vst [vmem:[%s282 + $0x4f8] sm:$0xff] %v2571
      %2797 = vst.msk [vmem:[%s282 + $0x500] sm:$0xff] %vm2642, %v2572
      %2798 = vst [vmem:[%s282 + $0x508] sm:$0xff] %v2573
      %2799 = vst [vmem:[%s282 + $0x510] sm:$0xff] %v2574
      %2800 = vst [vmem:[%s282 + $0x518] sm:$0xff] %v2575
      %2801 = vst [vmem:[%s282 + $0x520] sm:$0xff] %v2576
      %2802 = vst [vmem:[%s282 + $0x528] sm:$0xff] %v2577
      %2803 = vst [vmem:[%s282 + $0x530] sm:$0xff] %v2578
      %2804 = vst.msk [vmem:[%s282 + $0x538] sm:$0xff] %vm2642, %v2579
      %2805 = vst [vmem:[%s282 + $0x540] sm:$0xff] %v2580
      %2806 = vst [vmem:[%s282 + $0x548] sm:$0xff] %v2581
      %2807 = vst [vmem:[%s282 + $0x550] sm:$0xff] %v2582
      %2808 = vst [vmem:[%s282 + $0x558] sm:$0xff] %v2583
      %2809 = vst [vmem:[%s282 + $0x560] sm:$0xff] %v2584
      %2810 = vst [vmem:[%s282 + $0x568] sm:$0xff] %v2585
      %2811 = vst.msk [vmem:[%s282 + $0x570] sm:$0xff] %vm2642, %v2586
      %2812 = vst [vmem:[%s282 + $0x578] sm:$0xff] %v2587
      %2813 = vst [vmem:[%s282 + $0x580] sm:$0xff] %v2588
      %2814 = vst [vmem:[%s282 + $0x588] sm:$0xff] %v2589
      %2815 = vst [vmem:[%s282 + $0x590] sm:$0xff] %v2590
      %2816 = vst [vmem:[%s282 + $0x598] sm:$0xff] %v2591
      %2817 = vst [vmem:[%s282 + $0x5a0] sm:$0xff] %v2592
      %2818 = vst.msk [vmem:[%s282 + $0x5a8] sm:$0xff] %vm2642, %v2593
      %2819 = vst [vmem:[%s282 + $0x5b0] sm:$0xff] %v2594
      %2820 = vst [vmem:[%s282 + $0x5b8] sm:$0xff] %v2595
      %2821 = vst [vmem:[%s282 + $0x5c0] sm:$0xff] %v2596
      %2822 = vst [vmem:[%s282 + $0x5c8] sm:$0xff] %v2597
      %2823 = vst [vmem:[%s282 + $0x5d0] sm:$0xff] %v2598
      %2824 = vst [vmem:[%s282 + $0x5d8] sm:$0xff] %v2599
      %2825 = vst.msk [vmem:[%s282 + $0x5e0] sm:$0xff] %vm2642, %v2600
      %2826 = vst [vmem:[%s282 + $0x5e8] sm:$0xff] %v2601
      %2827 = vst [vmem:[%s282 + $0x5f0] sm:$0xff] %v2602
      %2828 = vst [vmem:[%s282 + $0x5f8] sm:$0xff] %v2603
      %2829 = vst [vmem:[%s282 + $0x600] sm:$0xff] %v2604
      %2830 = vst [vmem:[%s282 + $0x608] sm:$0xff] %v2605
      %2831 = vst [vmem:[%s282 + $0x610] sm:$0xff] %v2606
      %2832 = vst.msk [vmem:[%s282 + $0x618] sm:$0xff] %vm2642, %v2607
      %2833 = vst [vmem:[%s282 + $0x620] sm:$0xff] %v2608
      %2834 = vst [vmem:[%s282 + $0x628] sm:$0xff] %v2609
      %2835 = vst [vmem:[%s282 + $0x630] sm:$0xff] %v2610
      %2836 = vst [vmem:[%s282 + $0x638] sm:$0xff] %v2611
      %2837 = vst [vmem:[%s282 + $0x640] sm:$0xff] %v2612
      %2838 = vst [vmem:[%s282 + $0x648] sm:$0xff] %v2613
      %2839 = vst.msk [vmem:[%s282 + $0x650] sm:$0xff] %vm2642, %v2614
      %2840 = vst [vmem:[%s282 + $0x658] sm:$0xff] %v2615
      %2841 = vst [vmem:[%s282 + $0x660] sm:$0xff] %v2616
      %2842 = vst [vmem:[%s282 + $0x668] sm:$0xff] %v2617
      %2843 = vst [vmem:[%s282 + $0x670] sm:$0xff] %v2618
      %2844 = vst [vmem:[%s282 + $0x678] sm:$0xff] %v2619
      %2845 = vst [vmem:[%s282 + $0x680] sm:$0xff] %v2620
      %2846 = vst.msk [vmem:[%s282 + $0x688] sm:$0xff] %vm2642, %v2621
      %2847 = vst [vmem:[%s282 + $0x690] sm:$0xff] %v2622
      %2848 = vst [vmem:[%s282 + $0x698] sm:$0xff] %v2623
      %2849 = vst [vmem:[%s282 + $0x6a0] sm:$0xff] %v2624
      %2850 = vst [vmem:[%s282 + $0x6a8] sm:$0xff] %v2625
      %2851 = vst [vmem:[%s282 + $0x6b0] sm:$0xff] %v2626
      %2852 = vst [vmem:[%s282 + $0x6b8] sm:$0xff] %v2627
      %2853 = vst.msk [vmem:[%s282 + $0x6c0] sm:$0xff] %vm2642, %v2628
      %2854 = vst [vmem:[%s282 + $0x6c8] sm:$0xff] %v2629
      %2855 = vst [vmem:[%s282 + $0x6d0] sm:$0xff] %v2630
      %2856 = vst [vmem:[%s282 + $0x6d8] sm:$0xff] %v2631
      %2857 = vst [vmem:[%s282 + $0x6e0] sm:$0xff] %v2632
      %2858 = vst [vmem:[%s282 + $0x6e8] sm:$0xff] %v2633
      %2859 = vst [vmem:[%s282 + $0x6f0] sm:$0xff] %v2634
      %2860 = vst.msk [vmem:[%s282 + $0x6f8] sm:$0xff] %vm2642, %v2635
      %s2861 = smul.u32 32, %s18
      %p2862 = scmp.lt.s32.totalorder %s2861, 63
      %s2863 = scalar_select %p2862, %s2861, 63
      %s2864 = smul.addr %s2863, 7
      %s2865 = smul.addr %s2864, 8
      %s2866 = scalar_lea.vmem %s7, %s2865
      // Predicated region
      $region49: #{generator_forward.1} parent=47 // pred_check
        %p2867 = pneg %p188
      $region50: #{generator_forward.1} parent=47 // pred_check_branch
        %2869 = sbr.rel (%p2867) target = $region52
      $region51: #{generator_forward.1} parent=47 // pred_region
        %s2870 = smul.u32 32, %s18
      $region52: #{generator_forward.1} parent=47 // pred_fallthru
        _
    $region48: #{generator_forward.1} parent=5 // pred_fallthru
      _
    %p2871 = scmp.le.s32.totalorder 2, %s13
    // Predicated region
    $region53: #{generator_forward.1} parent=5 // pred_check
      %p2872 = pneg %p2871
    $region54: #{generator_forward.1} parent=5 // pred_check_branch
      %2874 = sbr.rel (%p2872) target = $region56
    $region55: #{generator_forward.1} parent=5 // pred_region
      %s2875 = ssub.s32 %s13, 2
      // Predicated region
      $region57: #{generator_forward.1} parent=55 // pred_check
        %p2876 = pneg %p194
      $region58: #{generator_forward.1} parent=55 // pred_check_branch
        %2878 = sbr.rel (%p2876) target = $region60
      $region59: #{generator_forward.1} parent=55 // pred_region
        %s2879 = smul.u32 32, %s19
        %p2880 = scmp.lt.s32.totalorder %s2879, 63
        %s2881 = scalar_select %p2880, %s2879, 63
        %s2882 = smul.addr %s2881, 7
        %s2883 = smul.addr %s2882, 8
        %s2884 = scalar_lea.vmem %s7, %s2883
      $region60: #{generator_forward.1} parent=55 // pred_fallthru
        _
    $region56: #{generator_forward.1} parent=5 // pred_fallthru
      _
  $region6: #{generator_forward.1} parent=0 // loop_footer
    %s17 = sadd.s32 1, %s13
  $region7: #{generator_forward.1} parent=0 // loop_footer_branch
    %12 = sbr.rel target = $region3
  $region8: #{generator_forward.1} parent=0 // loop_exit
    _

</llo_original>
